<compile_context>
chip_gen: v6e
topology: v6e:2x2x1
jax: 0.10.0
libtpu: 0.0.40
codegen_flags: <defaults>
</compile_context>

<pallas_src>
import math

import jax
import jax.numpy as jnp
from jax.experimental import pallas as pl
from jax.experimental.pallas import tpu as pltpu


def _vmem_specs(n):
    return [pl.BlockSpec(memory_space=pltpu.MemorySpace.VMEM) for _ in range(n)]


def _bf16(x):
    return x.astype(jnp.bfloat16)


# ------------------------------------------------------------- in-kernel helpers
def _gcn(g_eff, h_eff, w, b):
    """ReLU((g_eff @ h_eff) @ W + b): bf16 MXU operands, f32 accumulation."""
    gh = jnp.dot(_bf16(g_eff), _bf16(h_eff), preferred_element_type=jnp.float32)
    z = jnp.dot(_bf16(gh), _bf16(w), preferred_element_type=jnp.float32) + b
    return jnp.maximum(z, 0.0)


def _pool_scores(h_new, pw_row, pb):
    """sigmoid(h_new @ pw + pb), emitted lane-dense as (1, k) via a trans_b dot."""
    zp = jax.lax.dot_general(
        pw_row, h_new, (((1,), (1,)), ((), ())),
        preferred_element_type=jnp.float32) + pb
    return pl.reciprocal(1.0 + jnp.exp(-zp), approx=True)


def _two_hop(bin_g):
    """bool(bool(g) @ bool(g)) with exact 0/1 arithmetic (bf16 MXU, f32 acc)."""
    ug = _bf16(bin_g)
    ug2 = jnp.dot(ug, ug, preferred_element_type=jnp.float32)
    return (ug2 != 0.0).astype(jnp.float32)


def _onehot_rows(idx_col, n):
    """P (k, n): P[i, j] = (idx[i] == j).  Exact row-selection matrix."""
    k = idx_col.shape[0]
    cols = jax.lax.broadcasted_iota(jnp.int32, (k, n), 1)
    return (cols == idx_col).astype(jnp.float32)


def _onehot_cols(idx_row, n):
    """P^T (n, k): PT[j, i] = (idx[i] == j).  Exact scatter matrix."""
    k = idx_row.shape[1]
    rows = jax.lax.broadcasted_iota(jnp.int32, (n, k), 0)
    return (rows == idx_row).astype(jnp.float32)


def _pool_apply(ung_prev, h_prev, idx_col, val_col):
    """Fused top_k_graph body (minus top_k itself): returns
    (g_sub 0/1, deg row-sums, h_eff) where g_sub @ h_eff == norm_g(g_sub) @ (h[idx]*values)."""
    n_prev = ung_prev.shape[0]
    p = _onehot_rows(idx_col, n_prev)                       # (k, n_prev), exact
    g_rows = jnp.dot(p, ung_prev, preferred_element_type=jnp.float32)
    g_sub = jax.lax.dot_general(                            # g_rows @ P^T (trans_b)
        g_rows, p, (((1,), (1,)), ((), ())), preferred_element_type=jnp.float32)
    deg = jnp.sum(g_sub, axis=1, keepdims=True)             # (k, 1) row degrees
    h_sel = jnp.dot(p, h_prev, preferred_element_type=jnp.float32)   # exact gather
    h_eff = h_sel * (val_col / deg)                         # fold top-k gate + norm_g
    return g_sub, deg, h_eff


# ------------------------------------------------ down layer 0 (no pool fused)
def _down_first_kernel(g_ref, h_ref, w_ref, b_ref, pw_ref, pb_ref,
                       h_out_ref, scores_ref, ung_ref):
    g = g_ref[...]
    h_new = _gcn(g, h_ref[...], w_ref[...], b_ref[...])
    h_out_ref[...] = h_new
    scores_ref[...] = _pool_scores(h_new, pw_ref[...], pb_ref[...])
    ung_ref[...] = _two_hop((g != 0.0).astype(jnp.float32))


def down_layer_first(g, h, w, b, pw, pb):
    n, d = h.shape
    return pl.pallas_call(
        _down_first_kernel,
        out_shape=(
            jax.ShapeDtypeStruct((n, d), jnp.float32),   # h'
            jax.ShapeDtypeStruct((1, n), jnp.float32),   # scores, lane-dense
            jax.ShapeDtypeStruct((n, n), jnp.float32),   # un_g (2-hop adjacency)
        ),
        in_specs=_vmem_specs(6),
        out_specs=tuple(_vmem_specs(3)),
    )(g, h, w, b.reshape(1, -1), pw.reshape(1, -1), pb.reshape(1, 1))


# --------------------------------- down layer i>0: pool-apply of level i-1 fused
def _down_fused_kernel(ungp_ref, hp_ref, idx_ref, val_ref, w_ref, b_ref,
                       pw_ref, pb_ref,
                       h_out_ref, scores_ref, ung_ref, gsub_ref, deg_ref):
    g_sub, deg, h_eff = _pool_apply(ungp_ref[...], hp_ref[...],
                                    idx_ref[...], val_ref[...])
    gsub_ref[...] = g_sub
    deg_ref[...] = deg
    h_new = _gcn(g_sub, h_eff, w_ref[...], b_ref[...])
    h_out_ref[...] = h_new
    scores_ref[...] = _pool_scores(h_new, pw_ref[...], pb_ref[...])
    ung_ref[...] = _two_hop((g_sub != 0.0).astype(jnp.float32))


def down_layer_fused(un_g_prev, h_prev, idx_col, val_col, w, b, pw, pb):
    k = idx_col.shape[0]
    d = h_prev.shape[1]
    return pl.pallas_call(
        _down_fused_kernel,
        out_shape=(
            jax.ShapeDtypeStruct((k, d), jnp.float32),   # h'
            jax.ShapeDtypeStruct((1, k), jnp.float32),   # scores, lane-dense
            jax.ShapeDtypeStruct((k, k), jnp.float32),   # un_g at this level
            jax.ShapeDtypeStruct((k, k), jnp.float32),   # g_sub (0/1 pattern)
            jax.ShapeDtypeStruct((k, 1), jnp.float32),   # row degrees
        ),
        in_specs=_vmem_specs(8),
        out_specs=tuple(_vmem_specs(5)),
    )(un_g_prev, h_prev, idx_col, val_col, w, b.reshape(1, -1),
      pw.reshape(1, -1), pb.reshape(1, 1))


# ----------------------------------------- bottom GCN with last pool-apply fused
def _bottom_fused_kernel(ungp_ref, hp_ref, idx_ref, val_ref, w_ref, b_ref, o_ref):
    g_sub, _, h_eff = _pool_apply(ungp_ref[...], hp_ref[...],
                                  idx_ref[...], val_ref[...])
    o_ref[...] = _gcn(g_sub, h_eff, w_ref[...], b_ref[...])


def bottom_fused(un_g_prev, h_prev, idx_col, val_col, w, b):
    k = idx_col.shape[0]
    d_out = w.shape[1]
    return pl.pallas_call(
        _bottom_fused_kernel,
        out_shape=jax.ShapeDtypeStruct((k, d_out), jnp.float32),
        in_specs=_vmem_specs(6),
        out_specs=pl.BlockSpec(memory_space=pltpu.MemorySpace.VMEM),
    )(un_g_prev, h_prev, idx_col, val_col, w, b.reshape(1, -1))


# ------------------------------------ fused Unpool + up-GCN + residual kernels
def _up_body(g_ref, deg_ref, idx_row_ref, h_ref, w_ref, b_ref, res_ref):
    n_lvl = g_ref.shape[0]
    pt = _onehot_cols(idx_row_ref[...], n_lvl)                  # (n_lvl, k)
    h_scat = jnp.dot(pt, h_ref[...], preferred_element_type=jnp.float32)
    h_eff = h_scat / deg_ref[...]        # fold norm_g column scaling (deg==1 at lvl 0)
    return _gcn(g_ref[...], h_eff, w_ref[...], b_ref[...]) + res_ref[...]


def _up_kernel(g_ref, deg_ref, idx_row_ref, h_ref, w_ref, b_ref, res_ref, o_ref):
    o_ref[...] = _up_body(g_ref, deg_ref, idx_row_ref, h_ref, w_ref, b_ref, res_ref)


def _up_last_kernel(g_ref, deg_ref, idx_row_ref, h_ref, w_ref, b_ref, res_ref,
                    org_ref, o_ref, final_ref):
    h_up = _up_body(g_ref, deg_ref, idx_row_ref, h_ref, w_ref, b_ref, res_ref)
    o_ref[...] = h_up
    final_ref[...] = h_up + org_ref[...]     # final org_h residual fused here


def up_layer(g_repr, deg_col, idx_row, h_small, w, b, res):
    n = g_repr.shape[0]
    d_out = w.shape[1]
    return pl.pallas_call(
        _up_kernel,
        out_shape=jax.ShapeDtypeStruct((n, d_out), jnp.float32),
        in_specs=_vmem_specs(7),
        out_specs=pl.BlockSpec(memory_space=pltpu.MemorySpace.VMEM),
    )(g_repr, deg_col, idx_row, h_small, w, b.reshape(1, -1), res)


def up_layer_last(g_repr, deg_col, idx_row, h_small, w, b, res, org):
    n = g_repr.shape[0]
    d_out = w.shape[1]
    return pl.pallas_call(
        _up_last_kernel,
        out_shape=(jax.ShapeDtypeStruct((n, d_out), jnp.float32),
                   jax.ShapeDtypeStruct((n, d_out), jnp.float32)),
        in_specs=_vmem_specs(8),
        out_specs=tuple(_vmem_specs(2)),
    )(g_repr, deg_col, idx_row, h_small, w, b.reshape(1, -1), res, org)


# -------------------------------------------------------- parameter creation
def init_linear(key, in_dim, out_dim):
    kw, kb = jax.random.split(key)
    bound = 1.0 / math.sqrt(in_dim)
    w = jax.random.uniform(kw, (in_dim, out_dim), minval=-bound, maxval=bound,
                           dtype=jnp.float32)
    b = jax.random.uniform(kb, (out_dim,), minval=-bound, maxval=bound,
                           dtype=jnp.float32)
    return w, b


def init_graph_unet_params(key, ks, dim):
    l_n = len(ks)
    keys = jax.random.split(key, 3 * l_n + 1)
    return {
        "bottom": init_linear(keys[0], dim, dim),
        "down": [init_linear(keys[1 + i], dim, dim) for i in range(l_n)],
        "up": [init_linear(keys[1 + l_n + i], dim, dim) for i in range(l_n)],
        "pool": [init_linear(keys[1 + 2 * l_n + i], dim, 1) for i in range(l_n)],
    }


# ------------------------------------------------------------ GraphUnet fwd
def graph_unet_forward(params, ks, g, h):
    # TODO(synk): Dropout is the identity here (eval mode / drop_p = 0).
    l_n = len(ks)
    n0 = g.shape[0]
    org_h = h

    # level-0 adjacency is the user-provided (already normalized) g; deg == 1.
    adj_repr = [(g, jnp.ones((n0, 1), jnp.float32))]
    idx_rows, idx_cols, val_cols = [], [], []
    down_outs, hs = [], []

    # ---- down path: one fused pallas_call per layer
    un_g = None
    cur_n = n0
    for i in range(l_n):
        w, b = params["down"][i]
        pw, pb = params["pool"][i]
        if i == 0:
            h_new, scores, un_g = down_layer_first(g, h, w, b, pw, pb)
        else:
            h_new, scores, un_g, g_sub, deg = down_layer_fused(
                un_g, down_outs[-1], idx_cols[-1], val_cols[-1], w, b, pw, pb)
            adj_repr.append((g_sub, deg))
        down_outs.append(h_new)

        # TODO(synk): top-k (data-dependent sort) stays in plain JAX.
        kk = max(1, int(ks[i] * cur_n))
        vals, idx = jax.lax.top_k(scores, kk)        # lane-dense (1, kk)
        idx_rows.append(idx)
        idx_cols.append(idx.reshape(kk, 1))
        val_cols.append(vals.reshape(kk, 1))
        cur_n = kk

    # ---- bottom GCN (last pool-apply fused in)
    wb, bb = params["bottom"]
    h = bottom_fused(un_g, down_outs[-1], idx_cols[-1], val_cols[-1], wb, bb)

    # ---- up path: Unpool + GCN + residual fused per layer
    for i in range(l_n):
        up_idx = l_n - 1 - i
        g_repr, deg = adj_repr[up_idx]
        idx_row = idx_rows[up_idx]
        w, b = params["up"][i]
        res = down_outs[up_idx]
        if i < l_n - 1:
            h = up_layer(g_repr, deg, idx_row, h, w, b, res)
            hs.append(h)
        else:
            h_up, h = up_layer_last(g_repr, deg, idx_row, h, w, b, res, org_h)
            hs.append(h_up)
            hs.append(h)
    return hs


if __name__ == "__main__":
    key = jax.random.PRNGKey(0)
    N, dim = 16, 32
    ks = [0.8, 0.6]

    k_adj, k_h, k_par = jax.random.split(key, 3)
    # symmetric adjacency with self-loops (guarantees nonzero degrees)
    adj = (jax.random.uniform(k_adj, (N, N)) < 0.3).astype(jnp.float32)
    adj = jnp.maximum(adj, adj.T)
    adj = jnp.minimum(adj + jnp.eye(N, dtype=jnp.float32), 1.0)
    g = adj / jnp.sum(adj, axis=1, keepdims=True)
    h = jax.random.normal(k_h, (N, dim), dtype=jnp.float32)

    params = init_graph_unet_params(k_par, ks, dim)

    fwd = jax.jit(lambda p, gg, hh: graph_unet_forward(p, ks, gg, hh))
    hs = fwd(params, g, h)
    for out in hs:
        jax.block_until_ready(out)

    # basic sanity: l_n + 1 outputs, last two at full graph size, finite values
    assert len(hs) == len(ks) + 1
    assert hs[-1].shape == (N, dim)
    assert bool(jnp.all(jnp.isfinite(hs[-1])))
    assert bool(jnp.all(jnp.isfinite(hs[0])))

    print("KERNEL_OK")
</pallas_src>

<mosaic_0001>
module attributes {stable_mosaic.version = 11 : i64} {
  func.func @_down_first_kernel(%arg0: memref<16x16xf32, #tpu.memory_space<vmem>>, %arg1: memref<16x32xf32, #tpu.memory_space<vmem>>, %arg2: memref<32x32xf32, #tpu.memory_space<vmem>>, %arg3: memref<1x32xf32, #tpu.memory_space<vmem>>, %arg4: memref<1x32xf32, #tpu.memory_space<vmem>>, %arg5: memref<1x1xf32, #tpu.memory_space<vmem>>, %arg6: memref<16x32xf32, #tpu.memory_space<vmem>>, %arg7: memref<1x16xf32, #tpu.memory_space<vmem>>, %arg8: memref<16x16xf32, #tpu.memory_space<vmem>>) attributes {dimension_semantics = [], scalar_prefetch = 0 : i64, scratch_operands = 0 : i64, tpu.core_type = #tpu.core_type<tc>} {
    %c0 = arith.constant 0 : index
    %c0_0 = arith.constant 0 : index
    %0 = vector.load %arg0[%c0, %c0_0] : memref<16x16xf32, #tpu.memory_space<vmem>>, vector<16x16xf32>
    %c0_1 = arith.constant 0 : index
    %c0_2 = arith.constant 0 : index
    %1 = vector.load %arg1[%c0_1, %c0_2] : memref<16x32xf32, #tpu.memory_space<vmem>>, vector<16x32xf32>
    %c0_3 = arith.constant 0 : index
    %c0_4 = arith.constant 0 : index
    %2 = vector.load %arg2[%c0_3, %c0_4] : memref<32x32xf32, #tpu.memory_space<vmem>>, vector<32x32xf32>
    %c0_5 = arith.constant 0 : index
    %c0_6 = arith.constant 0 : index
    %3 = vector.load %arg3[%c0_5, %c0_6] : memref<1x32xf32, #tpu.memory_space<vmem>>, vector<1x32xf32>
    %4 = arith.truncf %0 : vector<16x16xf32> to vector<16x16xbf16>
    %5 = arith.truncf %1 : vector<16x32xf32> to vector<16x32xbf16>
    %cst = arith.constant dense<0.000000e+00> : vector<16x32xf32>
    %6 = tpu.matmul %4, %5, %cst {dimension_numbers = #tpu.dot_dimension_numbers<[1], [0], [0], [1], [0, 0, 1, 1], [], []>} : vector<16x16xbf16>, vector<16x32xbf16>, vector<16x32xf32> -> vector<16x32xf32>
    %7 = arith.truncf %6 : vector<16x32xf32> to vector<16x32xbf16>
    %8 = arith.truncf %2 : vector<32x32xf32> to vector<32x32xbf16>
    %cst_7 = arith.constant dense<0.000000e+00> : vector<16x32xf32>
    %9 = tpu.matmul %7, %8, %cst_7 {dimension_numbers = #tpu.dot_dimension_numbers<[1], [0], [0], [1], [0, 0, 1, 1], [], []>} : vector<16x32xbf16>, vector<32x32xbf16>, vector<16x32xf32> -> vector<16x32xf32>
    %10 = vector.broadcast %3 : vector<1x32xf32> to vector<16x32xf32>
    %11 = arith.addf %9, %10 : vector<16x32xf32>
    %cst_8 = arith.constant 0.000000e+00 : f32
    %12 = vector.broadcast %cst_8 : f32 to vector<16x32xf32>
    %13 = arith.maximumf %11, %12 : vector<16x32xf32>
    %c0_9 = arith.constant 0 : index
    %c0_10 = arith.constant 0 : index
    %14 = vector.load %arg6[%c0_9, %c0_10] : memref<16x32xf32, #tpu.memory_space<vmem>>, vector<16x32xf32>
    tpu.vector_store %arg6[%c0_9, %c0_10], %13 {strides = array<i32>} : memref<16x32xf32, #tpu.memory_space<vmem>>, vector<16x32xf32>,
    %c0_11 = arith.constant 0 : index
    %c0_12 = arith.constant 0 : index
    %15 = vector.load %arg4[%c0_11, %c0_12] : memref<1x32xf32, #tpu.memory_space<vmem>>, vector<1x32xf32>
    %c0_13 = arith.constant 0 : index
    %c0_14 = arith.constant 0 : index
    %16 = vector.load %arg5[%c0_13, %c0_14] : memref<1x1xf32, #tpu.memory_space<vmem>>, vector<1x1xf32>
    %cst_15 = arith.constant dense<0.000000e+00> : vector<1x16xf32>
    %17 = tpu.matmul %15, %13, %cst_15 {dimension_numbers = #tpu.dot_dimension_numbers<[1], [1], [0], [0], [0, 0, 1, 0], [], []>} : vector<1x32xf32>, vector<16x32xf32>, vector<1x16xf32> -> vector<1x16xf32>
    %18 = vector.broadcast %16 : vector<1x1xf32> to vector<1x16xf32>
    %19 = arith.addf %17, %18 : vector<1x16xf32>
    %cst_16 = arith.constant 0.000000e+00 : f32
    %20 = vector.broadcast %cst_16 : f32 to vector<1x16xf32>
    %21 = arith.subf %20, %19 : vector<1x16xf32>
    %22 = math.exp %21 : vector<1x16xf32>
    %cst_17 = arith.constant 1.000000e+00 : f32
    %23 = vector.broadcast %cst_17 : f32 to vector<1x16xf32>
    %24 = arith.addf %23, %22 : vector<1x16xf32>
    %25 = tpu.reciprocal %24 {approx = true} : vector<1x16xf32> -> vector<1x16xf32>
    %c0_18 = arith.constant 0 : index
    %c0_19 = arith.constant 0 : index
    %26 = vector.load %arg7[%c0_18, %c0_19] : memref<1x16xf32, #tpu.memory_space<vmem>>, vector<1x16xf32>
    tpu.vector_store %arg7[%c0_18, %c0_19], %25 {strides = array<i32>} : memref<1x16xf32, #tpu.memory_space<vmem>>, vector<1x16xf32>,
    %cst_20 = arith.constant 0.000000e+00 : f32
    %27 = vector.broadcast %cst_20 : f32 to vector<16x16xf32>
    %28 = arith.cmpf one, %0, %27 : vector<16x16xf32>
    %29 = arith.extui %28 : vector<16x16xi1> to vector<16x16xi32>
    %30 = arith.sitofp %29 : vector<16x16xi32> to vector<16x16xf32>
    %31 = arith.truncf %30 : vector<16x16xf32> to vector<16x16xbf16>
    %cst_21 = arith.constant dense<0.000000e+00> : vector<16x16xf32>
    %32 = tpu.matmul %31, %31, %cst_21 {dimension_numbers = #tpu.dot_dimension_numbers<[1], [0], [0], [1], [0, 0, 1, 1], [], []>} : vector<16x16xbf16>, vector<16x16xbf16>, vector<16x16xf32> -> vector<16x16xf32>
    %cst_22 = arith.constant 0.000000e+00 : f32
    %33 = vector.broadcast %cst_22 : f32 to vector<16x16xf32>
    %34 = arith.cmpf one, %32, %33 : vector<16x16xf32>
    %35 = arith.extui %34 : vector<16x16xi1> to vector<16x16xi32>
    %36 = arith.sitofp %35 : vector<16x16xi32> to vector<16x16xf32>
    %c0_23 = arith.constant 0 : index
    %c0_24 = arith.constant 0 : index
    %37 = vector.load %arg8[%c0_23, %c0_24] : memref<16x16xf32, #tpu.memory_space<vmem>>, vector<16x16xf32>
    tpu.vector_store %arg8[%c0_23, %c0_24], %36 {strides = array<i32>} : memref<16x16xf32, #tpu.memory_space<vmem>>, vector<16x16xf32>,
    return
  }
}

module attributes {stable_mosaic.version = 11 : i64} {
  func.func @_down_fused_kernel(%arg0: memref<16x16xf32, #tpu.memory_space<vmem>>, %arg1: memref<16x32xf32, #tpu.memory_space<vmem>>, %arg2: memref<12x1xi32, #tpu.memory_space<vmem>>, %arg3: memref<12x1xf32, #tpu.memory_space<vmem>>, %arg4: memref<32x32xf32, #tpu.memory_space<vmem>>, %arg5: memref<1x32xf32, #tpu.memory_space<vmem>>, %arg6: memref<1x32xf32, #tpu.memory_space<vmem>>, %arg7: memref<1x1xf32, #tpu.memory_space<vmem>>, %arg8: memref<12x32xf32, #tpu.memory_space<vmem>>, %arg9: memref<1x12xf32, #tpu.memory_space<vmem>>, %arg10: memref<12x12xf32, #tpu.memory_space<vmem>>, %arg11: memref<12x12xf32, #tpu.memory_space<vmem>>, %arg12: memref<12x1xf32, #tpu.memory_space<vmem>>) attributes {dimension_semantics = [], scalar_prefetch = 0 : i64, scratch_operands = 0 : i64, tpu.core_type = #tpu.core_type<tc>} {
    %c0 = arith.constant 0 : index
    %c0_0 = arith.constant 0 : index
    %0 = vector.load %arg0[%c0, %c0_0] : memref<16x16xf32, #tpu.memory_space<vmem>>, vector<16x16xf32>
    %c0_1 = arith.constant 0 : index
    %c0_2 = arith.constant 0 : index
    %1 = vector.load %arg1[%c0_1, %c0_2] : memref<16x32xf32, #tpu.memory_space<vmem>>, vector<16x32xf32>
    %c0_3 = arith.constant 0 : index
    %c0_4 = arith.constant 0 : index
    %2 = vector.load %arg2[%c0_3, %c0_4] : memref<12x1xi32, #tpu.memory_space<vmem>>, vector<12x1xi32>
    %c0_5 = arith.constant 0 : index
    %c0_6 = arith.constant 0 : index
    %3 = vector.load %arg3[%c0_5, %c0_6] : memref<12x1xf32, #tpu.memory_space<vmem>>, vector<12x1xf32>
    %4 = tpu.iota {dimensions = array<i32: 1>} : vector<12x16xi32>
    %5 = vector.broadcast %2 : vector<12x1xi32> to vector<12x16xi32>
    %6 = arith.cmpi eq, %4, %5 : vector<12x16xi32>
    %7 = arith.extui %6 : vector<12x16xi1> to vector<12x16xi32>
    %8 = arith.sitofp %7 : vector<12x16xi32> to vector<12x16xf32>
    %cst = arith.constant dense<0.000000e+00> : vector<12x16xf32>
    %9 = tpu.matmul %8, %0, %cst {dimension_numbers = #tpu.dot_dimension_numbers<[1], [0], [0], [1], [0, 0, 1, 1], [], []>} : vector<12x16xf32>, vector<16x16xf32>, vector<12x16xf32> -> vector<12x16xf32>
    %cst_7 = arith.constant dense<0.000000e+00> : vector<12x12xf32>
    %10 = tpu.matmul %9, %8, %cst_7 {dimension_numbers = #tpu.dot_dimension_numbers<[1], [1], [0], [0], [0, 0, 1, 0], [], []>} : vector<12x16xf32>, vector<12x16xf32>, vector<12x12xf32> -> vector<12x12xf32>
    %cst_8 = arith.constant dense<0.000000e+00> : vector<12xf32>
    %11 = vector.multi_reduction <add>, %10, %cst_8 [1] : vector<12x12xf32> to vector<12xf32>
    %12 = vector.shape_cast %11 : vector<12xf32> to vector<12x1xf32>
    %cst_9 = arith.constant dense<0.000000e+00> : vector<12x32xf32>
    %13 = tpu.matmul %8, %1, %cst_9 {dimension_numbers = #tpu.dot_dimension_numbers<[1], [0], [0], [1], [0, 0, 1, 1], [], []>} : vector<12x16xf32>, vector<16x32xf32>, vector<12x32xf32> -> vector<12x32xf32>
    %14 = arith.divf %3, %12 : vector<12x1xf32>
    %15 = vector.broadcast %14 : vector<12x1xf32> to vector<12x32xf32>
    %16 = arith.mulf %13, %15 : vector<12x32xf32>
    %c0_10 = arith.constant 0 : index
    %c0_11 = arith.constant 0 : index
    %17 = vector.load %arg11[%c0_10, %c0_11] : memref<12x12xf32, #tpu.memory_space<vmem>>, vector<12x12xf32>
    tpu.vector_store %arg11[%c0_10, %c0_11], %10 {strides = array<i32>} : memref<12x12xf32, #tpu.memory_space<vmem>>, vector<12x12xf32>,
    %c0_12 = arith.constant 0 : index
    %c0_13 = arith.constant 0 : index
    %18 = vector.load %arg12[%c0_12, %c0_13] : memref<12x1xf32, #tpu.memory_space<vmem>>, vector<12x1xf32>
    tpu.vector_store %arg12[%c0_12, %c0_13], %12 {strides = array<i32>} : memref<12x1xf32, #tpu.memory_space<vmem>>, vector<12x1xf32>,
    %c0_14 = arith.constant 0 : index
    %c0_15 = arith.constant 0 : index
    %19 = vector.load %arg4[%c0_14, %c0_15] : memref<32x32xf32, #tpu.memory_space<vmem>>, vector<32x32xf32>
    %c0_16 = arith.constant 0 : index
    %c0_17 = arith.constant 0 : index
    %20 = vector.load %arg5[%c0_16, %c0_17] : memref<1x32xf32, #tpu.memory_space<vmem>>, vector<1x32xf32>
    %21 = arith.truncf %10 : vector<12x12xf32> to vector<12x12xbf16>
    %22 = arith.truncf %16 : vector<12x32xf32> to vector<12x32xbf16>
    %cst_18 = arith.constant dense<0.000000e+00> : vector<12x32xf32>
    %23 = tpu.matmul %21, %22, %cst_18 {dimension_numbers = #tpu.dot_dimension_numbers<[1], [0], [0], [1], [0, 0, 1, 1], [], []>} : vector<12x12xbf16>, vector<12x32xbf16>, vector<12x32xf32> -> vector<12x32xf32>
    %24 = arith.truncf %23 : vector<12x32xf32> to vector<12x32xbf16>
    %25 = arith.truncf %19 : vector<32x32xf32> to vector<32x32xbf16>
    %cst_19 = arith.constant dense<0.000000e+00> : vector<12x32xf32>
    %26 = tpu.matmul %24, %25, %cst_19 {dimension_numbers = #tpu.dot_dimension_numbers<[1], [0], [0], [1], [0, 0, 1, 1], [], []>} : vector<12x32xbf16>, vector<32x32xbf16>, vector<12x32xf32> -> vector<12x32xf32>
    %27 = vector.broadcast %20 : vector<1x32xf32> to vector<12x32xf32>
    %28 = arith.addf %26, %27 : vector<12x32xf32>
    %cst_20 = arith.constant 0.000000e+00 : f32
    %29 = vector.broadcast %cst_20 : f32 to vector<12x32xf32>
    %30 = arith.maximumf %28, %29 : vector<12x32xf32>
    %c0_21 = arith.constant 0 : index
    %c0_22 = arith.constant 0 : index
    %31 = vector.load %arg8[%c0_21, %c0_22] : memref<12x32xf32, #tpu.memory_space<vmem>>, vector<12x32xf32>
    tpu.vector_store %arg8[%c0_21, %c0_22], %30 {strides = array<i32>} : memref<12x32xf32, #tpu.memory_space<vmem>>, vector<12x32xf32>,
    %c0_23 = arith.constant 0 : index
    %c0_24 = arith.constant 0 : index
    %32 = vector.load %arg6[%c0_23, %c0_24] : memref<1x32xf32, #tpu.memory_space<vmem>>, vector<1x32xf32>
    %c0_25 = arith.constant 0 : index
    %c0_26 = arith.constant 0 : index
    %33 = vector.load %arg7[%c0_25, %c0_26] : memref<1x1xf32, #tpu.memory_space<vmem>>, vector<1x1xf32>
    %cst_27 = arith.constant dense<0.000000e+00> : vector<1x12xf32>
    %34 = tpu.matmul %32, %30, %cst_27 {dimension_numbers = #tpu.dot_dimension_numbers<[1], [1], [0], [0], [0, 0, 1, 0], [], []>} : vector<1x32xf32>, vector<12x32xf32>, vector<1x12xf32> -> vector<1x12xf32>
    %35 = vector.broadcast %33 : vector<1x1xf32> to vector<1x12xf32>
    %36 = arith.addf %34, %35 : vector<1x12xf32>
    %cst_28 = arith.constant 0.000000e+00 : f32
    %37 = vector.broadcast %cst_28 : f32 to vector<1x12xf32>
    %38 = arith.subf %37, %36 : vector<1x12xf32>
    %39 = math.exp %38 : vector<1x12xf32>
    %cst_29 = arith.constant 1.000000e+00 : f32
    %40 = vector.broadcast %cst_29 : f32 to vector<1x12xf32>
    %41 = arith.addf %40, %39 : vector<1x12xf32>
    %42 = tpu.reciprocal %41 {approx = true} : vector<1x12xf32> -> vector<1x12xf32>
    %c0_30 = arith.constant 0 : index
    %c0_31 = arith.constant 0 : index
    %43 = vector.load %arg9[%c0_30, %c0_31] : memref<1x12xf32, #tpu.memory_space<vmem>>, vector<1x12xf32>
    tpu.vector_store %arg9[%c0_30, %c0_31], %42 {strides = array<i32>} : memref<1x12xf32, #tpu.memory_space<vmem>>, vector<1x12xf32>,
    %cst_32 = arith.constant 0.000000e+00 : f32
    %44 = vector.broadcast %cst_32 : f32 to vector<12x12xf32>
    %45 = arith.cmpf one, %10, %44 : vector<12x12xf32>
    %46 = arith.extui %45 : vector<12x12xi1> to vector<12x12xi32>
    %47 = arith.sitofp %46 : vector<12x12xi32> to vector<12x12xf32>
    %48 = arith.truncf %47 : vector<12x12xf32> to vector<12x12xbf16>
    %cst_33 = arith.constant dense<0.000000e+00> : vector<12x12xf32>
    %49 = tpu.matmul %48, %48, %cst_33 {dimension_numbers = #tpu.dot_dimension_numbers<[1], [0], [0], [1], [0, 0, 1, 1], [], []>} : vector<12x12xbf16>, vector<12x12xbf16>, vector<12x12xf32> -> vector<12x12xf32>
    %cst_34 = arith.constant 0.000000e+00 : f32
    %50 = vector.broadcast %cst_34 : f32 to vector<12x12xf32>
    %51 = arith.cmpf one, %49, %50 : vector<12x12xf32>
    %52 = arith.extui %51 : vector<12x12xi1> to vector<12x12xi32>
    %53 = arith.sitofp %52 : vector<12x12xi32> to vector<12x12xf32>
    %c0_35 = arith.constant 0 : index
    %c0_36 = arith.constant 0 : index
    %54 = vector.load %arg10[%c0_35, %c0_36] : memref<12x12xf32, #tpu.memory_space<vmem>>, vector<12x12xf32>
    tpu.vector_store %arg10[%c0_35, %c0_36], %53 {strides = array<i32>} : memref<12x12xf32, #tpu.memory_space<vmem>>, vector<12x12xf32>,
    return
  }
}

module attributes {stable_mosaic.version = 11 : i64} {
  func.func @_bottom_fused_kernel(%arg0: memref<12x12xf32, #tpu.memory_space<vmem>>, %arg1: memref<12x32xf32, #tpu.memory_space<vmem>>, %arg2: memref<7x1xi32, #tpu.memory_space<vmem>>, %arg3: memref<7x1xf32, #tpu.memory_space<vmem>>, %arg4: memref<32x32xf32, #tpu.memory_space<vmem>>, %arg5: memref<1x32xf32, #tpu.memory_space<vmem>>, %arg6: memref<7x32xf32, #tpu.memory_space<vmem>>) attributes {dimension_semantics = [], scalar_prefetch = 0 : i64, scratch_operands = 0 : i64, tpu.core_type = #tpu.core_type<tc>} {
    %c0 = arith.constant 0 : index
    %c0_0 = arith.constant 0 : index
    %0 = vector.load %arg0[%c0, %c0_0] : memref<12x12xf32, #tpu.memory_space<vmem>>, vector<12x12xf32>
    %c0_1 = arith.constant 0 : index
    %c0_2 = arith.constant 0 : index
    %1 = vector.load %arg1[%c0_1, %c0_2] : memref<12x32xf32, #tpu.memory_space<vmem>>, vector<12x32xf32>
    %c0_3 = arith.constant 0 : index
    %c0_4 = arith.constant 0 : index
    %2 = vector.load %arg2[%c0_3, %c0_4] : memref<7x1xi32, #tpu.memory_space<vmem>>, vector<7x1xi32>
    %c0_5 = arith.constant 0 : index
    %c0_6 = arith.constant 0 : index
    %3 = vector.load %arg3[%c0_5, %c0_6] : memref<7x1xf32, #tpu.memory_space<vmem>>, vector<7x1xf32>
    %4 = tpu.iota {dimensions = array<i32: 1>} : vector<7x12xi32>
    %5 = vector.broadcast %2 : vector<7x1xi32> to vector<7x12xi32>
    %6 = arith.cmpi eq, %4, %5 : vector<7x12xi32>
    %7 = arith.extui %6 : vector<7x12xi1> to vector<7x12xi32>
    %8 = arith.sitofp %7 : vector<7x12xi32> to vector<7x12xf32>
    %cst = arith.constant dense<0.000000e+00> : vector<7x12xf32>
    %9 = tpu.matmul %8, %0, %cst {dimension_numbers = #tpu.dot_dimension_numbers<[1], [0], [0], [1], [0, 0, 1, 1], [], []>} : vector<7x12xf32>, vector<12x12xf32>, vector<7x12xf32> -> vector<7x12xf32>
    %cst_7 = arith.constant dense<0.000000e+00> : vector<7x7xf32>
    %10 = tpu.matmul %9, %8, %cst_7 {dimension_numbers = #tpu.dot_dimension_numbers<[1], [1], [0], [0], [0, 0, 1, 0], [], []>} : vector<7x12xf32>, vector<7x12xf32>, vector<7x7xf32> -> vector<7x7xf32>
    %cst_8 = arith.constant dense<0.000000e+00> : vector<7xf32>
    %11 = vector.multi_reduction <add>, %10, %cst_8 [1] : vector<7x7xf32> to vector<7xf32>
    %12 = vector.shape_cast %11 : vector<7xf32> to vector<7x1xf32>
    %cst_9 = arith.constant dense<0.000000e+00> : vector<7x32xf32>
    %13 = tpu.matmul %8, %1, %cst_9 {dimension_numbers = #tpu.dot_dimension_numbers<[1], [0], [0], [1], [0, 0, 1, 1], [], []>} : vector<7x12xf32>, vector<12x32xf32>, vector<7x32xf32> -> vector<7x32xf32>
    %14 = arith.divf %3, %12 : vector<7x1xf32>
    %15 = vector.broadcast %14 : vector<7x1xf32> to vector<7x32xf32>
    %16 = arith.mulf %13, %15 : vector<7x32xf32>
    %c0_10 = arith.constant 0 : index
    %c0_11 = arith.constant 0 : index
    %17 = vector.load %arg4[%c0_10, %c0_11] : memref<32x32xf32, #tpu.memory_space<vmem>>, vector<32x32xf32>
    %c0_12 = arith.constant 0 : index
    %c0_13 = arith.constant 0 : index
    %18 = vector.load %arg5[%c0_12, %c0_13] : memref<1x32xf32, #tpu.memory_space<vmem>>, vector<1x32xf32>
    %19 = arith.truncf %10 : vector<7x7xf32> to vector<7x7xbf16>
    %20 = arith.truncf %16 : vector<7x32xf32> to vector<7x32xbf16>
    %cst_14 = arith.constant dense<0.000000e+00> : vector<7x32xf32>
    %21 = tpu.matmul %19, %20, %cst_14 {dimension_numbers = #tpu.dot_dimension_numbers<[1], [0], [0], [1], [0, 0, 1, 1], [], []>} : vector<7x7xbf16>, vector<7x32xbf16>, vector<7x32xf32> -> vector<7x32xf32>
    %22 = arith.truncf %21 : vector<7x32xf32> to vector<7x32xbf16>
    %23 = arith.truncf %17 : vector<32x32xf32> to vector<32x32xbf16>
    %cst_15 = arith.constant dense<0.000000e+00> : vector<7x32xf32>
    %24 = tpu.matmul %22, %23, %cst_15 {dimension_numbers = #tpu.dot_dimension_numbers<[1], [0], [0], [1], [0, 0, 1, 1], [], []>} : vector<7x32xbf16>, vector<32x32xbf16>, vector<7x32xf32> -> vector<7x32xf32>
    %25 = vector.broadcast %18 : vector<1x32xf32> to vector<7x32xf32>
    %26 = arith.addf %24, %25 : vector<7x32xf32>
    %cst_16 = arith.constant 0.000000e+00 : f32
    %27 = vector.broadcast %cst_16 : f32 to vector<7x32xf32>
    %28 = arith.maximumf %26, %27 : vector<7x32xf32>
    %c0_17 = arith.constant 0 : index
    %c0_18 = arith.constant 0 : index
    %29 = vector.load %arg6[%c0_17, %c0_18] : memref<7x32xf32, #tpu.memory_space<vmem>>, vector<7x32xf32>
    tpu.vector_store %arg6[%c0_17, %c0_18], %28 {strides = array<i32>} : memref<7x32xf32, #tpu.memory_space<vmem>>, vector<7x32xf32>,
    return
  }
}

module attributes {stable_mosaic.version = 11 : i64} {
  func.func @_up_last_kernel(%arg0: memref<16x16xf32, #tpu.memory_space<vmem>>, %arg1: memref<16x1xf32, #tpu.memory_space<vmem>>, %arg2: memref<1x12xi32, #tpu.memory_space<vmem>>, %arg3: memref<12x32xf32, #tpu.memory_space<vmem>>, %arg4: memref<32x32xf32, #tpu.memory_space<vmem>>, %arg5: memref<1x32xf32, #tpu.memory_space<vmem>>, %arg6: memref<16x32xf32, #tpu.memory_space<vmem>>, %arg7: memref<16x32xf32, #tpu.memory_space<vmem>>, %arg8: memref<16x32xf32, #tpu.memory_space<vmem>>, %arg9: memref<16x32xf32, #tpu.memory_space<vmem>>) attributes {dimension_semantics = [], scalar_prefetch = 0 : i64, scratch_operands = 0 : i64, tpu.core_type = #tpu.core_type<tc>} {
    %c0 = arith.constant 0 : index
    %c0_0 = arith.constant 0 : index
    %0 = vector.load %arg2[%c0, %c0_0] : memref<1x12xi32, #tpu.memory_space<vmem>>, vector<1x12xi32>
    %1 = tpu.iota {dimensions = array<i32: 0>} : vector<16x12xi32>
    %2 = vector.broadcast %0 : vector<1x12xi32> to vector<16x12xi32>
    %3 = arith.cmpi eq, %1, %2 : vector<16x12xi32>
    %4 = arith.extui %3 : vector<16x12xi1> to vector<16x12xi32>
    %5 = arith.sitofp %4 : vector<16x12xi32> to vector<16x12xf32>
    %c0_1 = arith.constant 0 : index
    %c0_2 = arith.constant 0 : index
    %6 = vector.load %arg3[%c0_1, %c0_2] : memref<12x32xf32, #tpu.memory_space<vmem>>, vector<12x32xf32>
    %cst = arith.constant dense<0.000000e+00> : vector<16x32xf32>
    %7 = tpu.matmul %5, %6, %cst {dimension_numbers = #tpu.dot_dimension_numbers<[1], [0], [0], [1], [0, 0, 1, 1], [], []>} : vector<16x12xf32>, vector<12x32xf32>, vector<16x32xf32> -> vector<16x32xf32>
    %c0_3 = arith.constant 0 : index
    %c0_4 = arith.constant 0 : index
    %8 = vector.load %arg1[%c0_3, %c0_4] : memref<16x1xf32, #tpu.memory_space<vmem>>, vector<16x1xf32>
    %9 = vector.broadcast %8 : vector<16x1xf32> to vector<16x32xf32>
    %10 = arith.divf %7, %9 : vector<16x32xf32>
    %c0_5 = arith.constant 0 : index
    %c0_6 = arith.constant 0 : index
    %11 = vector.load %arg0[%c0_5, %c0_6] : memref<16x16xf32, #tpu.memory_space<vmem>>, vector<16x16xf32>
    %c0_7 = arith.constant 0 : index
    %c0_8 = arith.constant 0 : index
    %12 = vector.load %arg4[%c0_7, %c0_8] : memref<32x32xf32, #tpu.memory_space<vmem>>, vector<32x32xf32>
    %c0_9 = arith.constant 0 : index
    %c0_10 = arith.constant 0 : index
    %13 = vector.load %arg5[%c0_9, %c0_10] : memref<1x32xf32, #tpu.memory_space<vmem>>, vector<1x32xf32>
    %14 = arith.truncf %11 : vector<16x16xf32> to vector<16x16xbf16>
    %15 = arith.truncf %10 : vector<16x32xf32> to vector<16x32xbf16>
    %cst_11 = arith.constant dense<0.000000e+00> : vector<16x32xf32>
    %16 = tpu.matmul %14, %15, %cst_11 {dimension_numbers = #tpu.dot_dimension_numbers<[1], [0], [0], [1], [0, 0, 1, 1], [], []>} : vector<16x16xbf16>, vector<16x32xbf16>, vector<16x32xf32> -> vector<16x32xf32>
    %17 = arith.truncf %16 : vector<16x32xf32> to vector<16x32xbf16>
    %18 = arith.truncf %12 : vector<32x32xf32> to vector<32x32xbf16>
    %cst_12 = arith.constant dense<0.000000e+00> : vector<16x32xf32>
    %19 = tpu.matmul %17, %18, %cst_12 {dimension_numbers = #tpu.dot_dimension_numbers<[1], [0], [0], [1], [0, 0, 1, 1], [], []>} : vector<16x32xbf16>, vector<32x32xbf16>, vector<16x32xf32> -> vector<16x32xf32>
    %20 = vector.broadcast %13 : vector<1x32xf32> to vector<16x32xf32>
    %21 = arith.addf %19, %20 : vector<16x32xf32>
    %cst_13 = arith.constant 0.000000e+00 : f32
    %22 = vector.broadcast %cst_13 : f32 to vector<16x32xf32>
    %23 = arith.maximumf %21, %22 : vector<16x32xf32>
    %c0_14 = arith.constant 0 : index
    %c0_15 = arith.constant 0 : index
    %24 = vector.load %arg6[%c0_14, %c0_15] : memref<16x32xf32, #tpu.memory_space<vmem>>, vector<16x32xf32>
    %25 = arith.addf %23, %24 : vector<16x32xf32>
    %c0_16 = arith.constant 0 : index
    %c0_17 = arith.constant 0 : index
    %26 = vector.load %arg8[%c0_16, %c0_17] : memref<16x32xf32, #tpu.memory_space<vmem>>, vector<16x32xf32>
    tpu.vector_store %arg8[%c0_16, %c0_17], %25 {strides = array<i32>} : memref<16x32xf32, #tpu.memory_space<vmem>>, vector<16x32xf32>,
    %c0_18 = arith.constant 0 : index
    %c0_19 = arith.constant 0 : index
    %27 = vector.load %arg7[%c0_18, %c0_19] : memref<16x32xf32, #tpu.memory_space<vmem>>, vector<16x32xf32>
    %28 = arith.addf %25, %27 : vector<16x32xf32>
    %c0_20 = arith.constant 0 : index
    %c0_21 = arith.constant 0 : index
    %29 = vector.load %arg9[%c0_20, %c0_21] : memref<16x32xf32, #tpu.memory_space<vmem>>, vector<16x32xf32>
    tpu.vector_store %arg9[%c0_20, %c0_21], %28 {strides = array<i32>} : memref<16x32xf32, #tpu.memory_space<vmem>>, vector<16x32xf32>,
    return
  }
}

module attributes {stable_mosaic.version = 11 : i64} {
  func.func @_up_kernel(%arg0: memref<12x12xf32, #tpu.memory_space<vmem>>, %arg1: memref<12x1xf32, #tpu.memory_space<vmem>>, %arg2: memref<1x7xi32, #tpu.memory_space<vmem>>, %arg3: memref<7x32xf32, #tpu.memory_space<vmem>>, %arg4: memref<32x32xf32, #tpu.memory_space<vmem>>, %arg5: memref<1x32xf32, #tpu.memory_space<vmem>>, %arg6: memref<12x32xf32, #tpu.memory_space<vmem>>, %arg7: memref<12x32xf32, #tpu.memory_space<vmem>>) attributes {dimension_semantics = [], scalar_prefetch = 0 : i64, scratch_operands = 0 : i64, tpu.core_type = #tpu.core_type<tc>} {
    %c0 = arith.constant 0 : index
    %c0_0 = arith.constant 0 : index
    %0 = vector.load %arg2[%c0, %c0_0] : memref<1x7xi32, #tpu.memory_space<vmem>>, vector<1x7xi32>
    %1 = tpu.iota {dimensions = array<i32: 0>} : vector<12x7xi32>
    %2 = vector.broadcast %0 : vector<1x7xi32> to vector<12x7xi32>
    %3 = arith.cmpi eq, %1, %2 : vector<12x7xi32>
    %4 = arith.extui %3 : vector<12x7xi1> to vector<12x7xi32>
    %5 = arith.sitofp %4 : vector<12x7xi32> to vector<12x7xf32>
    %c0_1 = arith.constant 0 : index
    %c0_2 = arith.constant 0 : index
    %6 = vector.load %arg3[%c0_1, %c0_2] : memref<7x32xf32, #tpu.memory_space<vmem>>, vector<7x32xf32>
    %cst = arith.constant dense<0.000000e+00> : vector<12x32xf32>
    %7 = tpu.matmul %5, %6, %cst {dimension_numbers = #tpu.dot_dimension_numbers<[1], [0], [0], [1], [0, 0, 1, 1], [], []>} : vector<12x7xf32>, vector<7x32xf32>, vector<12x32xf32> -> vector<12x32xf32>
    %c0_3 = arith.constant 0 : index
    %c0_4 = arith.constant 0 : index
    %8 = vector.load %arg1[%c0_3, %c0_4] : memref<12x1xf32, #tpu.memory_space<vmem>>, vector<12x1xf32>
    %9 = vector.broadcast %8 : vector<12x1xf32> to vector<12x32xf32>
    %10 = arith.divf %7, %9 : vector<12x32xf32>
    %c0_5 = arith.constant 0 : index
    %c0_6 = arith.constant 0 : index
    %11 = vector.load %arg0[%c0_5, %c0_6] : memref<12x12xf32, #tpu.memory_space<vmem>>, vector<12x12xf32>
    %c0_7 = arith.constant 0 : index
    %c0_8 = arith.constant 0 : index
    %12 = vector.load %arg4[%c0_7, %c0_8] : memref<32x32xf32, #tpu.memory_space<vmem>>, vector<32x32xf32>
    %c0_9 = arith.constant 0 : index
    %c0_10 = arith.constant 0 : index
    %13 = vector.load %arg5[%c0_9, %c0_10] : memref<1x32xf32, #tpu.memory_space<vmem>>, vector<1x32xf32>
    %14 = arith.truncf %11 : vector<12x12xf32> to vector<12x12xbf16>
    %15 = arith.truncf %10 : vector<12x32xf32> to vector<12x32xbf16>
    %cst_11 = arith.constant dense<0.000000e+00> : vector<12x32xf32>
    %16 = tpu.matmul %14, %15, %cst_11 {dimension_numbers = #tpu.dot_dimension_numbers<[1], [0], [0], [1], [0, 0, 1, 1], [], []>} : vector<12x12xbf16>, vector<12x32xbf16>, vector<12x32xf32> -> vector<12x32xf32>
    %17 = arith.truncf %16 : vector<12x32xf32> to vector<12x32xbf16>
    %18 = arith.truncf %12 : vector<32x32xf32> to vector<32x32xbf16>
    %cst_12 = arith.constant dense<0.000000e+00> : vector<12x32xf32>
    %19 = tpu.matmul %17, %18, %cst_12 {dimension_numbers = #tpu.dot_dimension_numbers<[1], [0], [0], [1], [0, 0, 1, 1], [], []>} : vector<12x32xbf16>, vector<32x32xbf16>, vector<12x32xf32> -> vector<12x32xf32>
    %20 = vector.broadcast %13 : vector<1x32xf32> to vector<12x32xf32>
    %21 = arith.addf %19, %20 : vector<12x32xf32>
    %cst_13 = arith.constant 0.000000e+00 : f32
    %22 = vector.broadcast %cst_13 : f32 to vector<12x32xf32>
    %23 = arith.maximumf %21, %22 : vector<12x32xf32>
    %c0_14 = arith.constant 0 : index
    %c0_15 = arith.constant 0 : index
    %24 = vector.load %arg6[%c0_14, %c0_15] : memref<12x32xf32, #tpu.memory_space<vmem>>, vector<12x32xf32>
    %25 = arith.addf %23, %24 : vector<12x32xf32>
    %c0_16 = arith.constant 0 : index
    %c0_17 = arith.constant 0 : index
    %26 = vector.load %arg7[%c0_16, %c0_17] : memref<12x32xf32, #tpu.memory_space<vmem>>, vector<12x32xf32>
    tpu.vector_store %arg7[%c0_16, %c0_17], %25 {strides = array<i32>} : memref<12x32xf32, #tpu.memory_space<vmem>>, vector<12x32xf32>,
    return
  }
}

</mosaic_0001>

<llo_original>
// kernel: _lambda_.5
$region0: #{_lambda_.5}
  #allocation0 [shape = 'u32[]', space=smem, size = 0x4, offset = 0x4, fixed_abs, tag = 'smem constant byte address 0x4 - core index']
  #allocation1 [shape = 'u32[144,128]{1,0:T(1,128)}', space=vmem, size = 0x12000, scoped, tag = 'internal scratch']
  #allocation2 [shape = 'f32[1,1]{1,0:T(1,128)S(1)}', space=vmem, size = 0x200, scoped, tag = 'scoped memory for _lambda_.5']
  %s0 = inlined_call_operand.vmem [shape: f32[16,16], index: 0, kind: input, shape index: {}]
  %s1 = inlined_call_operand.hbm [shape: f32[16,32], index: 1, kind: input, shape index: {}]
  %s2 = inlined_call_operand.hbm [shape: f32[32,32], index: 2, kind: input, shape index: {}]
  %s3 = inlined_call_operand.vmem [shape: f32[1,32], index: 3, kind: input, shape index: {}]
  %s4 = inlined_call_operand.vmem [shape: f32[1,32], index: 4, kind: input, shape index: {}]
  %s5 = inlined_call_operand.<no memory space> [shape: f32[1,1], index: 5, kind: input, shape index: {}]
  %s6 = inlined_call_operand.vmem [shape: f32[16,32], index: 6, kind: output, shape index: {0}]
  %s7 = inlined_call_operand.vmem [shape: f32[1,16], index: 7, kind: output, shape index: {1}]
  %s8 = inlined_call_operand.vmem [shape: f32[16,16], index: 8, kind: output, shape index: {2}]
  %9 = xla_tuple %s6, %s7, %s8
  %s10 = sld [smem:[#allocation0]]
  $region58: #{_lambda_.5} parent=0
    _
  %s12 = ssub.s32 1, %s10
  %s13 = scalar_select 0, %s12, %s10
  %v14 = vstv %s5
  %15 = vst [vmem:[#allocation2] sm:$0x1] %v14
  $region1: #{_lambda_.5} parent=0
    #allocation3 [shape = 'u8[8192]{0}', space=vmem, size = 0x2000, scoped, tag = 'input window, operand 1, single buffered']
    #allocation4 [shape = 's32[1]{0}', space=sflag, size = 0x4, scoped, tag = 'scoped memory for _lambda_.5']
    #allocation5 [shape = 'u8[16384]{0}', space=vmem, size = 0x4000, scoped, tag = 'input window, operand 2, single buffered']
    #allocation6 [shape = 's32[1]{0}', space=sflag, size = 0x4, scoped, tag = 'scoped memory for _lambda_.5']
    %16 = vsyncpa [#allocation4], 0
    %17 = vsyncpa [#allocation6], 0
    // Predicated region
    $region2: #{_lambda_.5} parent=1 // pred_check
      _
    $region3: #{_lambda_.5} parent=1 // pred_check_branch
      %19 = sbr.rel (0) target = $region5
    $region4: #{_lambda_.5} parent=1 // pred_region
      _
    $region5: #{_lambda_.5} parent=1 // pred_fallthru
      _
    // Predicated region
    $region6: #{_lambda_.5} parent=1 // pred_check
      _
    $region7: #{_lambda_.5} parent=1 // pred_check_branch
      %21 = sbr.rel (0) target = $region9
    $region8: #{_lambda_.5} parent=1 // pred_region
      %s23 = ssub.s32 256, 256
      %24 = vsyncadd [#allocation4], %s23
      %s25 = sshll.u32 [#allocation3], 4
      %s26 = int_to_ptr.vmem [resolvable:$true] %s25
      %31 = dma.hbm_to_vmem [thread:$0]  %s1, 256, %s26, [#allocation4], 128, 128, 8
    $region9: #{_lambda_.5} parent=1 // pred_fallthru
      _
    // Predicated region
    $region10: #{_lambda_.5} parent=1 // pred_check
      _
    $region11: #{_lambda_.5} parent=1 // pred_check_branch
      %33 = sbr.rel (0) target = $region13
    $region12: #{_lambda_.5} parent=1 // pred_region
      %s35 = ssub.s32 512, 512
      %36 = vsyncadd [#allocation6], %s35
      %s37 = sshll.u32 [#allocation5], 4
      %s38 = int_to_ptr.vmem [resolvable:$true] %s37
      %43 = dma.hbm_to_vmem [thread:$0]  %s2, 512, %s38, [#allocation6], 128, 128, 8
    $region13: #{_lambda_.5} parent=1 // pred_fallthru
      _
    // Predicated region
    $region14: #{_lambda_.5} parent=1 // pred_check
      _
    $region15: #{_lambda_.5} parent=1 // pred_check_branch
      %45 = sbr.rel (0) target = $region17
    $region16: #{_lambda_.5} parent=1 // pred_region
      _
    $region17: #{_lambda_.5} parent=1 // pred_fallthru
      _
    // Predicated region
    $region18: #{_lambda_.5} parent=1 // pred_check
      _
    $region19: #{_lambda_.5} parent=1 // pred_check_branch
      %47 = sbr.rel (0) target = $region21
    $region20: #{_lambda_.5} parent=1 // pred_region
      _
    $region21: #{_lambda_.5} parent=1 // pred_fallthru
      _
    // Predicated region
    $region22: #{_lambda_.5} parent=1 // pred_check
      _
    $region23: #{_lambda_.5} parent=1 // pred_check_branch
      %49 = sbr.rel (0) target = $region25
    $region24: #{_lambda_.5} parent=1 // pred_region
      _
    $region25: #{_lambda_.5} parent=1 // pred_fallthru
      _
    // Predicated region
    $region26: #{_lambda_.5} parent=1 // pred_check
      _
    $region27: #{_lambda_.5} parent=1 // pred_check_branch
      %51 = sbr.rel (0) target = $region29
    $region28: #{_lambda_.5} parent=1 // pred_region
      %52 = dma.done [#allocation4], 256
    $region29: #{_lambda_.5} parent=1 // pred_fallthru
      _
    // Predicated region
    $region30: #{_lambda_.5} parent=1 // pred_check
      _
    $region31: #{_lambda_.5} parent=1 // pred_check_branch
      %54 = sbr.rel (0) target = $region33
    $region32: #{_lambda_.5} parent=1 // pred_region
      %55 = dma.done [#allocation6], 512
    $region33: #{_lambda_.5} parent=1 // pred_fallthru
      _
    %v57 = vld [vmem:[%s0] sm:$0xff]
    %v58 = vld [vmem:[%s0 + $0x8] sm:$0xff]
    %v59 = vld [vmem:[#allocation3] sm:$0xff]
    %v60 = vld [vmem:[#allocation3 + $0x8] sm:$0xff]
    %v61 = vld [vmem:[#allocation5] sm:$0xff]
    %v62 = vld [vmem:[#allocation5 + $0x8] sm:$0xff]
    %v63 = vld [vmem:[#allocation5 + $0x10] sm:$0xff]
    %v64 = vld [vmem:[#allocation5 + $0x18] sm:$0xff]
    %v65 = vld [vmem:[%s3] sm:$0x1]
    %v66 = vpack.c.bf16 %v58, %v57
    %v67 = vpack.c.bf16 %v60, %v59
    %vm68 = vcmask 130048
    %v70 = vsel %vm68, %v66, 0
    %72 = vmatprep.subr.bf16.mxu0 0
    %73 = vmatpush1.bf16.msra.mxu0 0
    %74 = vmatprep.subr.bf16.mxu0 0
    %75 = vmatpush1.bf16.msra.mxu0 0
    %76 = vmatprep.subr.bf16.mxu0 0
    %77 = vmatpush1.bf16.msra.mxu0 0
    %78 = vmatprep.subr.bf16.mxu0 0
    %79 = vmatpush1.bf16.msra.mxu0 0
    %80 = vmatprep.subr.bf16.mxu0 0
    %81 = vmatpush1.bf16.msra.mxu0 0
    %82 = vmatprep.subr.bf16.mxu0 0
    %83 = vmatpush1.bf16.msra.mxu0 0
    %84 = vmatprep.subr.bf16.mxu0 0
    %85 = vmatpush1.bf16.msra.mxu0 0
    %86 = vmatprep.subr.bf16.mxu0 0
    %87 = vmatpush1.bf16.msra.mxu0 %v67
    %88 = vmatprep.subr.bf16.mxu0 0
    %89 = vmatpush2.bf16.msra.mxu0 0
    %90 = vmatprep.subr.bf16.mxu0 0
    %91 = vmatpush2.bf16.msra.mxu0 0
    %92 = vmatprep.subr.bf16.mxu0 0
    %93 = vmatpush2.bf16.msra.mxu0 0
    %94 = vmatprep.subr.bf16.mxu0 0
    %95 = vmatpush2.bf16.msra.mxu0 0
    %96 = vmatprep.subr.bf16.mxu0 0
    %97 = vmatpush2.bf16.msra.mxu0 0
    %98 = vmatprep.subr.bf16.mxu0 0
    %99 = vmatpush2.bf16.msra.mxu0 0
    %100 = vmatprep.subr.bf16.mxu0 0
    %101 = vmatpush2.bf16.msra.mxu0 0
    %102 = vmatprep.subr.bf16.mxu0 0
    %103 = vmatpush2.bf16.msra.mxu0 0
    %104 = vmatprep.mubr.bf16.mxu0 0
    %105 = vmatmul.mubr.bf16.gmra.mxu0 %v70
    %v106 = vpop.f32.mrf.mxu0
    %v107 = vadd.f32 0.0, %v106
    %v108 = vpop.f32.mrf.mxu0
    %v109 = vpop.f32.mrf.mxu0
    %v110 = vadd.f32 0.0, %v109
    %v111 = vpop.f32.mrf.mxu0
    %112 = vdwg.mxu0
    %v113 = vpack.c.bf16 %v110, %v107
    %v114 = vpack.c.bf16 %v62, %v61
    %v115 = vpack.c.bf16 %v64, %v63
    %v117 = vlaneseq
    %v118 = vshrl.u32 %v117, 7
    %v119 = vsub.s32 0, %v118
    %v120 = vrot.slane %v65, %v119
    %vm122 = vcmask 261120
    %v124 = vsel %vm122, %v113, 0
    %126 = vmatprep.subr.bf16.mxu0 0
    %127 = vmatpush1.bf16.msra.mxu0 0
    %128 = vmatprep.subr.bf16.mxu0 0
    %129 = vmatpush1.bf16.msra.mxu0 0
    %130 = vmatprep.subr.bf16.mxu0 0
    %131 = vmatpush1.bf16.msra.mxu0 0
    %132 = vmatprep.subr.bf16.mxu0 0
    %133 = vmatpush1.bf16.msra.mxu0 0
    %134 = vmatprep.subr.bf16.mxu0 0
    %135 = vmatpush1.bf16.msra.mxu0 0
    %136 = vmatprep.subr.bf16.mxu0 0
    %137 = vmatpush1.bf16.msra.mxu0 0
    %138 = vmatprep.subr.bf16.mxu0 0
    %139 = vmatpush1.bf16.msra.mxu0 %v115
    %140 = vmatprep.subr.bf16.mxu0 0
    %141 = vmatpush1.bf16.msra.mxu0 %v114
    %142 = vmatprep.subr.bf16.mxu0 0
    %143 = vmatpush2.bf16.msra.mxu0 0
    %144 = vmatprep.subr.bf16.mxu0 0
    %145 = vmatpush2.bf16.msra.mxu0 0
    %146 = vmatprep.subr.bf16.mxu0 0
    %147 = vmatpush2.bf16.msra.mxu0 0
    %148 = vmatprep.subr.bf16.mxu0 0
    %149 = vmatpush2.bf16.msra.mxu0 0
    %150 = vmatprep.subr.bf16.mxu0 0
    %151 = vmatpush2.bf16.msra.mxu0 0
    %152 = vmatprep.subr.bf16.mxu0 0
    %153 = vmatpush2.bf16.msra.mxu0 0
    %154 = vmatprep.subr.bf16.mxu0 0
    %155 = vmatpush2.bf16.msra.mxu0 0
    %156 = vmatprep.subr.bf16.mxu0 0
    %157 = vmatpush2.bf16.msra.mxu0 0
    %158 = vmatprep.mubr.bf16.mxu0 0
    %159 = vmatmul.mubr.bf16.gmra.mxu0 %v124
    %v160 = vpop.f32.mrf.mxu0
    %v161 = vadd.f32 %v120, %v160
    %v162 = vpop.f32.mrf.mxu0
    %v163 = vpop.f32.mrf.mxu0
    %v164 = vadd.f32 %v120, %v163
    %v165 = vpop.f32.mrf.mxu0
    %166 = vdwg.mxu0
    %v167 = vmax.f32 %v161, 0.0
    %v168 = vmax.f32 %v164, 0.0
    %169 = vst.msk [vmem:[%s6] sm:$0xff] %vm122, %v167
    %170 = vst.msk [vmem:[%s6 + $0x8] sm:$0xff] %vm122, %v168
    %v171 = vld [vmem:[%s4] sm:$0x1]
    %v172 = vld [vmem:[#allocation2] sm:$0x1]
    %174 = vset.pattern.permute.xlu0 0
    %175 = vperm.xlu0 %174, %v172
    %v176 = vpop.permute.xlu0 %175
    %v178 = vlaneseq
    %v179 = vshrl.u32 %v178, 7
    %v180 = vsub.s32 0, %v179
    %v181 = vrot.slane %v176, %v180
    %v183 = vsel %vm122, %v171, 0
    %v186 = vsel %vm122, %v167, 0
    %v189 = vsel %vm122, %v168, 0
    %191 = vmatprep.subr.mxu0 0.0
    %192 = vmatpush1.xpose.msra.mxu0 0.0
    %193 = vmatprep.subr.mxu0 0.0
    %194 = vmatpush1.xpose.msra.mxu0 0.0
    %195 = vmatprep.subr.mxu0 0.0
    %196 = vmatpush1.xpose.msra.mxu0 0.0
    %197 = vmatprep.subr.mxu0 0.0
    %198 = vmatpush1.xpose.msra.mxu0 0.0
    %199 = vmatprep.subr.mxu0 0.0
    %200 = vmatpush1.xpose.msra.mxu0 0.0
    %201 = vmatprep.subr.mxu0 0.0
    %202 = vmatpush1.xpose.msra.mxu0 0.0
    %203 = vmatprep.subr.mxu0 0.0
    %204 = vmatpush1.xpose.msra.mxu0 0.0
    %205 = vmatprep.subr.mxu0 0.0
    %206 = vmatpush1.xpose.msra.mxu0 0.0
    %207 = vmatprep.subr.mxu0 0.0
    %208 = vmatpush1.xpose.msra.mxu0 0.0
    %209 = vmatprep.subr.mxu0 0.0
    %210 = vmatpush1.xpose.msra.mxu0 0.0
    %211 = vmatprep.subr.mxu0 0.0
    %212 = vmatpush1.xpose.msra.mxu0 0.0
    %213 = vmatprep.subr.mxu0 0.0
    %214 = vmatpush1.xpose.msra.mxu0 0.0
    %215 = vmatprep.subr.mxu0 0.0
    %216 = vmatpush1.xpose.msra.mxu0 0.0
    %217 = vmatprep.subr.mxu0 0.0
    %218 = vmatpush1.xpose.msra.mxu0 0.0
    %219 = vmatprep.subr.mxu0 0.0
    %220 = vmatpush1.xpose.msra.mxu0 %v189
    %221 = vmatprep.subr.mxu0 0.0
    %222 = vmatpush1.xpose.msra.mxu0 %v186
    %223 = vmatprep.subr.mxu0 0.0
    %224 = vmatpush2.xpose.msra.mxu0 0.0
    %225 = vmatprep.subr.mxu0 0.0
    %226 = vmatpush2.xpose.msra.mxu0 0.0
    %227 = vmatprep.subr.mxu0 0.0
    %228 = vmatpush2.xpose.msra.mxu0 0.0
    %229 = vmatprep.subr.mxu0 0.0
    %230 = vmatpush2.xpose.msra.mxu0 0.0
    %231 = vmatprep.subr.mxu0 0.0
    %232 = vmatpush2.xpose.msra.mxu0 0.0
    %233 = vmatprep.subr.mxu0 0.0
    %234 = vmatpush2.xpose.msra.mxu0 0.0
    %235 = vmatprep.subr.mxu0 0.0
    %236 = vmatpush2.xpose.msra.mxu0 0.0
    %237 = vmatprep.subr.mxu0 0.0
    %238 = vmatpush2.xpose.msra.mxu0 0.0
    %239 = vmatprep.subr.mxu0 0.0
    %240 = vmatpush2.xpose.msra.mxu0 0.0
    %241 = vmatprep.subr.mxu0 0.0
    %242 = vmatpush2.xpose.msra.mxu0 0.0
    %243 = vmatprep.subr.mxu0 0.0
    %244 = vmatpush2.xpose.msra.mxu0 0.0
    %245 = vmatprep.subr.mxu0 0.0
    %246 = vmatpush2.xpose.msra.mxu0 0.0
    %247 = vmatprep.subr.mxu0 0.0
    %248 = vmatpush2.xpose.msra.mxu0 0.0
    %249 = vmatprep.subr.mxu0 0.0
    %250 = vmatpush2.xpose.msra.mxu0 0.0
    %251 = vmatprep.subr.mxu0 0.0
    %252 = vmatpush2.xpose.msra.mxu0 0.0
    %253 = vmatprep.subr.mxu0 0.0
    %254 = vmatpush2.xpose.msra.mxu0 0.0
    %255 = vmatprep.mubr.f32.mxu0 0.0
    %256 = vmatmul.mubr.f32.gmra.mxu0 %v183
    %v257 = vpop.f32.mrf.mxu0
    %v258 = vadd.f32 %v181, %v257
    %v259 = vpop.f32.mrf.mxu0
    %260 = vdwg.mxu0
    %v261 = vsub.f32 0.0, %v258
    %v262 = vmul.f32 %v261, 1.442695
    %v263 = vpow.pop %v262
    %v264 = vadd.f32 %v263, 1.0
    %v265 = vrcp.pop %v264
    %vm266 = vcmask 122880
    %267 = vst.msk [vmem:[%s7] sm:$0x1] %vm266, %v265
    %vm268 = vcmp.ne.f32.partialorder %v57, 0.0
    %vm269 = vcmp.ne.f32.partialorder %v58, 0.0
    %v270 = vsel %vm268, 1, 0
    %v271 = vsel %vm269, 1, 0
    %v272 = vcvt.s32.f32 %v270
    %v273 = vcvt.s32.f32 %v271
    %v274 = vpack.c.bf16 %v273, %v272
    %v276 = vsel %vm68, %v274, 0
    %278 = vmatprep.subr.bf16.mxu0 0
    %279 = vmatpush1.bf16.msra.mxu0 0
    %280 = vmatprep.subr.bf16.mxu0 0
    %281 = vmatpush1.bf16.msra.mxu0 0
    %282 = vmatprep.subr.bf16.mxu0 0
    %283 = vmatpush1.bf16.msra.mxu0 0
    %284 = vmatprep.subr.bf16.mxu0 0
    %285 = vmatpush1.bf16.msra.mxu0 0
    %286 = vmatprep.subr.bf16.mxu0 0
    %287 = vmatpush1.bf16.msra.mxu0 0
    %288 = vmatprep.subr.bf16.mxu0 0
    %289 = vmatpush1.bf16.msra.mxu0 0
    %290 = vmatprep.subr.bf16.mxu0 0
    %291 = vmatpush1.bf16.msra.mxu0 0
    %292 = vmatprep.subr.bf16.mxu0 0
    %293 = vmatpush1.bf16.msra.mxu0 %v274
    %294 = vmatprep.subr.bf16.mxu0 0
    %295 = vmatpush2.bf16.msra.mxu0 0
    %296 = vmatprep.subr.bf16.mxu0 0
    %297 = vmatpush2.bf16.msra.mxu0 0
    %298 = vmatprep.subr.bf16.mxu0 0
    %299 = vmatpush2.bf16.msra.mxu0 0
    %300 = vmatprep.subr.bf16.mxu0 0
    %301 = vmatpush2.bf16.msra.mxu0 0
    %302 = vmatprep.subr.bf16.mxu0 0
    %303 = vmatpush2.bf16.msra.mxu0 0
    %304 = vmatprep.subr.bf16.mxu0 0
    %305 = vmatpush2.bf16.msra.mxu0 0
    %306 = vmatprep.subr.bf16.mxu0 0
    %307 = vmatpush2.bf16.msra.mxu0 0
    %308 = vmatprep.subr.bf16.mxu0 0
    %309 = vmatpush2.bf16.msra.mxu0 0
    %310 = vmatprep.mubr.bf16.mxu0 0
    %311 = vmatmul.mubr.bf16.gmra.mxu0 %v276
    %v312 = vpop.f32.mrf.mxu0
    %v313 = vadd.f32 0.0, %v312
    %v314 = vpop.f32.mrf.mxu0
    %v315 = vpop.f32.mrf.mxu0
    %v316 = vadd.f32 0.0, %v315
    %v317 = vpop.f32.mrf.mxu0
    %318 = vdwg.mxu0
    %vm319 = vcmp.ne.f32.partialorder %v313, 0.0
    %vm320 = vcmp.ne.f32.partialorder %v316, 0.0
    %v321 = vsel %vm319, 1, 0
    %v322 = vsel %vm320, 1, 0
    %v323 = vcvt.s32.f32 %v321
    %v324 = vcvt.s32.f32 %v322
    %325 = vst.msk [vmem:[%s8] sm:$0xff] %vm68, %v323
    %326 = vst.msk [vmem:[%s8 + $0x8] sm:$0xff] %vm68, %v324
    // Predicated region
    $region34: #{_lambda_.5} parent=1 // pred_check
      _
    $region35: #{_lambda_.5} parent=1 // pred_check_branch
      %328 = sbr.rel (0) target = $region37
    $region36: #{_lambda_.5} parent=1 // pred_region
      _
    $region37: #{_lambda_.5} parent=1 // pred_fallthru
      _
    // Predicated region
    $region38: #{_lambda_.5} parent=1 // pred_check
      _
    $region39: #{_lambda_.5} parent=1 // pred_check_branch
      %330 = sbr.rel (0) target = $region41
    $region40: #{_lambda_.5} parent=1 // pred_region
      _
    $region41: #{_lambda_.5} parent=1 // pred_fallthru
      _
    // Predicated region
    $region42: #{_lambda_.5} parent=1 // pred_check
      _
    $region43: #{_lambda_.5} parent=1 // pred_check_branch
      %332 = sbr.rel (0) target = $region45
    $region44: #{_lambda_.5} parent=1 // pred_region
      _
    $region45: #{_lambda_.5} parent=1 // pred_fallthru
      _
    // Predicated region
    $region46: #{_lambda_.5} parent=1 // pred_check
      _
    $region47: #{_lambda_.5} parent=1 // pred_check_branch
      %334 = sbr.rel (0) target = $region49
    $region48: #{_lambda_.5} parent=1 // pred_region
      _
    $region49: #{_lambda_.5} parent=1 // pred_fallthru
      _
    // Predicated region
    $region50: #{_lambda_.5} parent=1 // pred_check
      _
    $region51: #{_lambda_.5} parent=1 // pred_check_branch
      %336 = sbr.rel (0) target = $region53
    $region52: #{_lambda_.5} parent=1 // pred_region
      _
    $region53: #{_lambda_.5} parent=1 // pred_fallthru
      _
    // Predicated region
    $region54: #{_lambda_.5} parent=1 // pred_check
      _
    $region55: #{_lambda_.5} parent=1 // pred_check_branch
      %338 = sbr.rel (0) target = $region57
    $region56: #{_lambda_.5} parent=1 // pred_region
      _
    $region57: #{_lambda_.5} parent=1 // pred_fallthru
      _
    %339 = vsyncpa [#allocation4], 1
    %340 = vsyncpa [#allocation6], 1

// kernel: _lambda_.6
$region0: #{_lambda_.6}
  #allocation0 [shape = 'u32[]', space=smem, size = 0x4, offset = 0x4, fixed_abs, tag = 'smem constant byte address 0x4 - core index']
  #allocation1 [shape = 'u32[144,128]{1,0:T(1,128)}', space=vmem, size = 0x12000, scoped, tag = 'internal scratch']
  #allocation2 [shape = 'f32[1,1]{1,0:T(1,128)S(1)}', space=vmem, size = 0x200, scoped, tag = 'scoped memory for _lambda_.6']
  %s0 = inlined_call_operand.vmem [shape: f32[16,16], index: 0, kind: input, shape index: {}]
  %s1 = inlined_call_operand.vmem [shape: f32[16,32], index: 1, kind: input, shape index: {}]
  %s2 = inlined_call_operand.vmem [shape: s32[12,1], index: 2, kind: input, shape index: {}]
  %s3 = inlined_call_operand.vmem [shape: f32[12,1], index: 3, kind: input, shape index: {}]
  %s4 = inlined_call_operand.vmem [shape: f32[32,32], index: 4, kind: input, shape index: {}]
  %s5 = inlined_call_operand.vmem [shape: f32[1,32], index: 5, kind: input, shape index: {}]
  %s6 = inlined_call_operand.vmem [shape: f32[1,32], index: 6, kind: input, shape index: {}]
  %s7 = inlined_call_operand.<no memory space> [shape: f32[1,1], index: 7, kind: input, shape index: {}]
  %s8 = inlined_call_operand.vmem [shape: f32[12,32], index: 8, kind: output, shape index: {0}]
  %s9 = inlined_call_operand.vmem [shape: f32[1,12], index: 9, kind: output, shape index: {1}]
  %s10 = inlined_call_operand.vmem [shape: f32[12,12], index: 10, kind: output, shape index: {2}]
  %s11 = inlined_call_operand.vmem [shape: f32[12,12], index: 11, kind: output, shape index: {3}]
  %s12 = inlined_call_operand.vmem [shape: f32[12,1], index: 12, kind: output, shape index: {4}]
  %13 = xla_tuple %s8, %s9, %s10, %s11, %s12
  %s14 = sld [smem:[#allocation0]]
  $region74: #{_lambda_.6} parent=0
    _
  %s16 = ssub.s32 1, %s14
  %s17 = scalar_select 0, %s16, %s14
  %v18 = vstv %s7
  %19 = vst [vmem:[#allocation2] sm:$0x1] %v18
  // Predicated region
  $region2: #{_lambda_.6} parent=0 // pred_check
    _
  $region3: #{_lambda_.6} parent=0 // pred_check_branch
    %21 = sbr.rel (0) target = $region5
  $region4: #{_lambda_.6} parent=0 // pred_region
    _
  $region5: #{_lambda_.6} parent=0 // pred_fallthru
    _
  // Predicated region
  $region6: #{_lambda_.6} parent=0 // pred_check
    _
  $region7: #{_lambda_.6} parent=0 // pred_check_branch
    %23 = sbr.rel (0) target = $region9
  $region8: #{_lambda_.6} parent=0 // pred_region
    _
  $region9: #{_lambda_.6} parent=0 // pred_fallthru
    _
  // Predicated region
  $region10: #{_lambda_.6} parent=0 // pred_check
    _
  $region11: #{_lambda_.6} parent=0 // pred_check_branch
    %25 = sbr.rel (0) target = $region13
  $region12: #{_lambda_.6} parent=0 // pred_region
    _
  $region13: #{_lambda_.6} parent=0 // pred_fallthru
    _
  // Predicated region
  $region14: #{_lambda_.6} parent=0 // pred_check
    _
  $region15: #{_lambda_.6} parent=0 // pred_check_branch
    %27 = sbr.rel (0) target = $region17
  $region16: #{_lambda_.6} parent=0 // pred_region
    _
  $region17: #{_lambda_.6} parent=0 // pred_fallthru
    _
  // Predicated region
  $region18: #{_lambda_.6} parent=0 // pred_check
    _
  $region19: #{_lambda_.6} parent=0 // pred_check_branch
    %29 = sbr.rel (0) target = $region21
  $region20: #{_lambda_.6} parent=0 // pred_region
    _
  $region21: #{_lambda_.6} parent=0 // pred_fallthru
    _
  // Predicated region
  $region22: #{_lambda_.6} parent=0 // pred_check
    _
  $region23: #{_lambda_.6} parent=0 // pred_check_branch
    %31 = sbr.rel (0) target = $region25
  $region24: #{_lambda_.6} parent=0 // pred_region
    _
  $region25: #{_lambda_.6} parent=0 // pred_fallthru
    _
  // Predicated region
  $region26: #{_lambda_.6} parent=0 // pred_check
    _
  $region27: #{_lambda_.6} parent=0 // pred_check_branch
    %33 = sbr.rel (0) target = $region29
  $region28: #{_lambda_.6} parent=0 // pred_region
    _
  $region29: #{_lambda_.6} parent=0 // pred_fallthru
    _
  // Predicated region
  $region30: #{_lambda_.6} parent=0 // pred_check
    _
  $region31: #{_lambda_.6} parent=0 // pred_check_branch
    %35 = sbr.rel (0) target = $region33
  $region32: #{_lambda_.6} parent=0 // pred_region
    _
  $region33: #{_lambda_.6} parent=0 // pred_fallthru
    _
  %v37 = vld [vmem:[%s0] sm:$0xff]
  %v38 = vld [vmem:[%s0 + $0x8] sm:$0xff]
  %v39 = vld [vmem:[%s1] sm:$0xff]
  %v40 = vld [vmem:[%s1 + $0x8] sm:$0xff]
  %v41 = vld [vmem:[%s2] sm:$0xff]
  %v42 = vld [vmem:[%s2 + $0x8] sm:$0xf]
  %v43 = vld [vmem:[%s3] sm:$0xff]
  %v44 = vld [vmem:[%s3 + $0x8] sm:$0xf]
  %v45 = vlaneseq
  %v46 = vand.u32 %v45, 127
  %47 = vset.pattern.permute.xlu0 0
  %48 = vperm.xlu0 %47, %v41
  %v49 = vpop.permute.xlu0 %48
  %50 = vset.pattern.permute.xlu0 0
  %51 = vperm.xlu0 %50, %v42
  %v52 = vpop.permute.xlu0 %51
  %vm53 = vcmp.eq.s32.totalorder %v46, %v49
  %vm54 = vcmp.eq.s32.totalorder %v46, %v52
  %v55 = vsel %vm53, 1, 0
  %v56 = vsel %vm54, 1, 0
  %v57 = vcvt.s32.f32 %v55
  %v58 = vcvt.s32.f32 %v56
  %vm59 = vcmask 130048
  %v61 = vsel %vm59, %v57, 0
  %v64 = vsel %vm59, %v58, 0
  %66 = vmatprep.subr.mxu0 0.0
  %67 = vmatpush1.msra.mxu0 0.0
  %68 = vmatprep.subr.mxu0 0.0
  %69 = vmatpush1.msra.mxu0 0.0
  %70 = vmatprep.subr.mxu0 0.0
  %71 = vmatpush1.msra.mxu0 0.0
  %72 = vmatprep.subr.mxu0 0.0
  %73 = vmatpush1.msra.mxu0 0.0
  %74 = vmatprep.subr.mxu0 0.0
  %75 = vmatpush1.msra.mxu0 0.0
  %76 = vmatprep.subr.mxu0 0.0
  %77 = vmatpush1.msra.mxu0 0.0
  %78 = vmatprep.subr.mxu0 0.0
  %79 = vmatpush1.msra.mxu0 0.0
  %80 = vmatprep.subr.mxu0 0.0
  %81 = vmatpush1.msra.mxu0 0.0
  %82 = vmatprep.subr.mxu0 0.0
  %83 = vmatpush1.msra.mxu0 0.0
  %84 = vmatprep.subr.mxu0 0.0
  %85 = vmatpush1.msra.mxu0 0.0
  %86 = vmatprep.subr.mxu0 0.0
  %87 = vmatpush1.msra.mxu0 0.0
  %88 = vmatprep.subr.mxu0 0.0
  %89 = vmatpush1.msra.mxu0 0.0
  %90 = vmatprep.subr.mxu0 0.0
  %91 = vmatpush1.msra.mxu0 0.0
  %92 = vmatprep.subr.mxu0 0.0
  %93 = vmatpush1.msra.mxu0 0.0
  %94 = vmatprep.subr.mxu0 0.0
  %95 = vmatpush1.msra.mxu0 %v38
  %96 = vmatprep.subr.mxu0 0.0
  %97 = vmatpush1.msra.mxu0 %v37
  %98 = vmatprep.subr.mxu0 0.0
  %99 = vmatpush2.msra.mxu0 0.0
  %100 = vmatprep.subr.mxu0 0.0
  %101 = vmatpush2.msra.mxu0 0.0
  %102 = vmatprep.subr.mxu0 0.0
  %103 = vmatpush2.msra.mxu0 0.0
  %104 = vmatprep.subr.mxu0 0.0
  %105 = vmatpush2.msra.mxu0 0.0
  %106 = vmatprep.subr.mxu0 0.0
  %107 = vmatpush2.msra.mxu0 0.0
  %108 = vmatprep.subr.mxu0 0.0
  %109 = vmatpush2.msra.mxu0 0.0
  %110 = vmatprep.subr.mxu0 0.0
  %111 = vmatpush2.msra.mxu0 0.0
  %112 = vmatprep.subr.mxu0 0.0
  %113 = vmatpush2.msra.mxu0 0.0
  %114 = vmatprep.subr.mxu0 0.0
  %115 = vmatpush2.msra.mxu0 0.0
  %116 = vmatprep.subr.mxu0 0.0
  %117 = vmatpush2.msra.mxu0 0.0
  %118 = vmatprep.subr.mxu0 0.0
  %119 = vmatpush2.msra.mxu0 0.0
  %120 = vmatprep.subr.mxu0 0.0
  %121 = vmatpush2.msra.mxu0 0.0
  %122 = vmatprep.subr.mxu0 0.0
  %123 = vmatpush2.msra.mxu0 0.0
  %124 = vmatprep.subr.mxu0 0.0
  %125 = vmatpush2.msra.mxu0 0.0
  %126 = vmatprep.subr.mxu0 0.0
  %127 = vmatpush2.msra.mxu0 0.0
  %128 = vmatprep.subr.mxu0 0.0
  %129 = vmatpush2.msra.mxu0 0.0
  %130 = vmatprep.mubr.f32.mxu0 0.0
  %131 = vmatmul.mubr.f32.gmra.mxu0 %v61
  %v132 = vpop.f32.mrf.mxu0
  %v133 = vadd.f32 0.0, %v132
  %v134 = vpop.f32.mrf.mxu0
  %135 = vmatprep.mubr.f32.mxu0 0.0
  %136 = vmatmul.mubr.f32.gmra.mxu0 %v64
  %v137 = vpop.f32.mrf.mxu0
  %v138 = vadd.f32 0.0, %v137
  %v139 = vpop.f32.mrf.mxu0
  %140 = vdwg.mxu0
  %v142 = vsel %vm59, %v133, 0
  %v145 = vsel %vm59, %v138, 0
  %147 = vmatprep.subr.mxu0 0.0
  %148 = vmatpush1.xpose.msra.mxu0 0.0
  %149 = vmatprep.subr.mxu0 0.0
  %150 = vmatpush1.xpose.msra.mxu0 0.0
  %151 = vmatprep.subr.mxu0 0.0
  %152 = vmatpush1.xpose.msra.mxu0 0.0
  %153 = vmatprep.subr.mxu0 0.0
  %154 = vmatpush1.xpose.msra.mxu0 0.0
  %155 = vmatprep.subr.mxu0 0.0
  %156 = vmatpush1.xpose.msra.mxu0 0.0
  %157 = vmatprep.subr.mxu0 0.0
  %158 = vmatpush1.xpose.msra.mxu0 0.0
  %159 = vmatprep.subr.mxu0 0.0
  %160 = vmatpush1.xpose.msra.mxu0 0.0
  %161 = vmatprep.subr.mxu0 0.0
  %162 = vmatpush1.xpose.msra.mxu0 0.0
  %163 = vmatprep.subr.mxu0 0.0
  %164 = vmatpush1.xpose.msra.mxu0 0.0
  %165 = vmatprep.subr.mxu0 0.0
  %166 = vmatpush1.xpose.msra.mxu0 0.0
  %167 = vmatprep.subr.mxu0 0.0
  %168 = vmatpush1.xpose.msra.mxu0 0.0
  %169 = vmatprep.subr.mxu0 0.0
  %170 = vmatpush1.xpose.msra.mxu0 0.0
  %171 = vmatprep.subr.mxu0 0.0
  %172 = vmatpush1.xpose.msra.mxu0 0.0
  %173 = vmatprep.subr.mxu0 0.0
  %174 = vmatpush1.xpose.msra.mxu0 0.0
  %175 = vmatprep.subr.mxu0 0.0
  %176 = vmatpush1.xpose.msra.mxu0 %v64
  %177 = vmatprep.subr.mxu0 0.0
  %178 = vmatpush1.xpose.msra.mxu0 %v61
  %179 = vmatprep.subr.mxu0 0.0
  %180 = vmatpush2.xpose.msra.mxu0 0.0
  %181 = vmatprep.subr.mxu0 0.0
  %182 = vmatpush2.xpose.msra.mxu0 0.0
  %183 = vmatprep.subr.mxu0 0.0
  %184 = vmatpush2.xpose.msra.mxu0 0.0
  %185 = vmatprep.subr.mxu0 0.0
  %186 = vmatpush2.xpose.msra.mxu0 0.0
  %187 = vmatprep.subr.mxu0 0.0
  %188 = vmatpush2.xpose.msra.mxu0 0.0
  %189 = vmatprep.subr.mxu0 0.0
  %190 = vmatpush2.xpose.msra.mxu0 0.0
  %191 = vmatprep.subr.mxu0 0.0
  %192 = vmatpush2.xpose.msra.mxu0 0.0
  %193 = vmatprep.subr.mxu0 0.0
  %194 = vmatpush2.xpose.msra.mxu0 0.0
  %195 = vmatprep.subr.mxu0 0.0
  %196 = vmatpush2.xpose.msra.mxu0 0.0
  %197 = vmatprep.subr.mxu0 0.0
  %198 = vmatpush2.xpose.msra.mxu0 0.0
  %199 = vmatprep.subr.mxu0 0.0
  %200 = vmatpush2.xpose.msra.mxu0 0.0
  %201 = vmatprep.subr.mxu0 0.0
  %202 = vmatpush2.xpose.msra.mxu0 0.0
  %203 = vmatprep.subr.mxu0 0.0
  %204 = vmatpush2.xpose.msra.mxu0 0.0
  %205 = vmatprep.subr.mxu0 0.0
  %206 = vmatpush2.xpose.msra.mxu0 0.0
  %207 = vmatprep.subr.mxu0 0.0
  %208 = vmatpush2.xpose.msra.mxu0 0.0
  %209 = vmatprep.subr.mxu0 0.0
  %210 = vmatpush2.xpose.msra.mxu0 0.0
  %211 = vmatprep.mubr.f32.mxu0 0.0
  %212 = vmatmul.mubr.f32.gmra.mxu0 %v142
  %v213 = vpop.f32.mrf.mxu0
  %v214 = vadd.f32 0.0, %v213
  %v215 = vpop.f32.mrf.mxu0
  %216 = vmatprep.mubr.f32.mxu0 0.0
  %217 = vmatmul.mubr.f32.gmra.mxu0 %v145
  %v218 = vpop.f32.mrf.mxu0
  %v219 = vadd.f32 0.0, %v218
  %v220 = vpop.f32.mrf.mxu0
  %221 = vdwg.mxu0
  %vm222 = vcmask 97280
  %v223 = vsel %vm222, %v214, 0.0
  %224 = vadd.xlane.f32.xlu0 %v223
  %v225 = vpop.xlane.xlu0 %224
  %vm226 = vcmask 93184
  %v227 = vsel %vm226, %v219, 0.0
  %228 = vadd.xlane.f32.xlu0 %v227
  %v229 = vpop.xlane.xlu0 %228
  %230 = vmatprep.subr.mxu0 0.0
  %231 = vmatpush1.msra.mxu0 0.0
  %232 = vmatprep.subr.mxu0 0.0
  %233 = vmatpush1.msra.mxu0 0.0
  %234 = vmatprep.subr.mxu0 0.0
  %235 = vmatpush1.msra.mxu0 0.0
  %236 = vmatprep.subr.mxu0 0.0
  %237 = vmatpush1.msra.mxu0 0.0
  %238 = vmatprep.subr.mxu0 0.0
  %239 = vmatpush1.msra.mxu0 0.0
  %240 = vmatprep.subr.mxu0 0.0
  %241 = vmatpush1.msra.mxu0 0.0
  %242 = vmatprep.subr.mxu0 0.0
  %243 = vmatpush1.msra.mxu0 0.0
  %244 = vmatprep.subr.mxu0 0.0
  %245 = vmatpush1.msra.mxu0 0.0
  %246 = vmatprep.subr.mxu0 0.0
  %247 = vmatpush1.msra.mxu0 0.0
  %248 = vmatprep.subr.mxu0 0.0
  %249 = vmatpush1.msra.mxu0 0.0
  %250 = vmatprep.subr.mxu0 0.0
  %251 = vmatpush1.msra.mxu0 0.0
  %252 = vmatprep.subr.mxu0 0.0
  %253 = vmatpush1.msra.mxu0 0.0
  %254 = vmatprep.subr.mxu0 0.0
  %255 = vmatpush1.msra.mxu0 0.0
  %256 = vmatprep.subr.mxu0 0.0
  %257 = vmatpush1.msra.mxu0 0.0
  %258 = vmatprep.subr.mxu0 0.0
  %259 = vmatpush1.msra.mxu0 %v40
  %260 = vmatprep.subr.mxu0 0.0
  %261 = vmatpush1.msra.mxu0 %v39
  %262 = vmatprep.subr.mxu0 0.0
  %263 = vmatpush2.msra.mxu0 0.0
  %264 = vmatprep.subr.mxu0 0.0
  %265 = vmatpush2.msra.mxu0 0.0
  %266 = vmatprep.subr.mxu0 0.0
  %267 = vmatpush2.msra.mxu0 0.0
  %268 = vmatprep.subr.mxu0 0.0
  %269 = vmatpush2.msra.mxu0 0.0
  %270 = vmatprep.subr.mxu0 0.0
  %271 = vmatpush2.msra.mxu0 0.0
  %272 = vmatprep.subr.mxu0 0.0
  %273 = vmatpush2.msra.mxu0 0.0
  %274 = vmatprep.subr.mxu0 0.0
  %275 = vmatpush2.msra.mxu0 0.0
  %276 = vmatprep.subr.mxu0 0.0
  %277 = vmatpush2.msra.mxu0 0.0
  %278 = vmatprep.subr.mxu0 0.0
  %279 = vmatpush2.msra.mxu0 0.0
  %280 = vmatprep.subr.mxu0 0.0
  %281 = vmatpush2.msra.mxu0 0.0
  %282 = vmatprep.subr.mxu0 0.0
  %283 = vmatpush2.msra.mxu0 0.0
  %284 = vmatprep.subr.mxu0 0.0
  %285 = vmatpush2.msra.mxu0 0.0
  %286 = vmatprep.subr.mxu0 0.0
  %287 = vmatpush2.msra.mxu0 0.0
  %288 = vmatprep.subr.mxu0 0.0
  %289 = vmatpush2.msra.mxu0 0.0
  %290 = vmatprep.subr.mxu0 0.0
  %291 = vmatpush2.msra.mxu0 0.0
  %292 = vmatprep.subr.mxu0 0.0
  %293 = vmatpush2.msra.mxu0 0.0
  %294 = vmatprep.mubr.f32.mxu0 0.0
  %295 = vmatmul.mubr.f32.gmra.mxu0 %v61
  %v296 = vpop.f32.mrf.mxu0
  %v297 = vadd.f32 0.0, %v296
  %v298 = vpop.f32.mrf.mxu0
  %299 = vmatprep.mubr.f32.mxu0 0.0
  %300 = vmatmul.mubr.f32.gmra.mxu0 %v64
  %v301 = vpop.f32.mrf.mxu0
  %v302 = vadd.f32 0.0, %v301
  %v303 = vpop.f32.mrf.mxu0
  %304 = vdwg.mxu0
  %v305 = vrcp.pop %v225
  %v306 = vmul.f32 %v43, %v305
  %v307 = vrcp.pop %v229
  %v308 = vmul.f32 %v44, %v307
  %310 = vset.pattern.permute.xlu0 0
  %311 = vperm.xlu0 %310, %v306
  %v312 = vpop.permute.xlu0 %311
  %315 = vset.pattern.permute.xlu0 0
  %316 = vperm.xlu0 %315, %v308
  %v317 = vpop.permute.xlu0 %316
  %v319 = vmul.f32 %v297, %v312
  %v320 = vmul.f32 %v302, %v317
  %321 = vst.msk [vmem:[%s11] sm:$0xff] %vm222, %v214
  %322 = vst.msk [vmem:[%s11 + $0x8] sm:$0xf] %vm226, %v219
  %vm323 = vcmask 7168
  %324 = vst.msk [vmem:[%s12] sm:$0xff] %vm323, %v225
  %vm325 = vcmask 3072
  %326 = vst.msk [vmem:[%s12 + $0x8] sm:$0xf] %vm325, %v229
  %v327 = vld [vmem:[%s4] sm:$0xff]
  %v328 = vld [vmem:[%s4 + $0x8] sm:$0xff]
  %v329 = vld [vmem:[%s4 + $0x10] sm:$0xff]
  %v330 = vld [vmem:[%s4 + $0x18] sm:$0xff]
  %v331 = vld [vmem:[%s5] sm:$0x1]
  %v332 = vpack.c.bf16 %v219, %v214
  %v333 = vpack.c.bf16 %v320, %v319
  %v335 = vsel %vm222, %v332, 0
  %vm337 = vcmask 1045504
  %v339 = vsel %vm337, %v333, 0
  %341 = vmatprep.subr.bf16.mxu0 0
  %342 = vmatpush1.bf16.msra.mxu0 0
  %343 = vmatprep.subr.bf16.mxu0 0
  %344 = vmatpush1.bf16.msra.mxu0 0
  %345 = vmatprep.subr.bf16.mxu0 0
  %346 = vmatpush1.bf16.msra.mxu0 0
  %347 = vmatprep.subr.bf16.mxu0 0
  %348 = vmatpush1.bf16.msra.mxu0 0
  %349 = vmatprep.subr.bf16.mxu0 0
  %350 = vmatpush1.bf16.msra.mxu0 0
  %351 = vmatprep.subr.bf16.mxu0 0
  %352 = vmatpush1.bf16.msra.mxu0 0
  %353 = vmatprep.subr.bf16.mxu0 0
  %354 = vmatpush1.bf16.msra.mxu0 0
  %355 = vmatprep.subr.bf16.mxu0 0
  %356 = vmatpush1.bf16.msra.mxu0 %v339
  %357 = vmatprep.subr.bf16.mxu0 0
  %358 = vmatpush2.bf16.msra.mxu0 0
  %359 = vmatprep.subr.bf16.mxu0 0
  %360 = vmatpush2.bf16.msra.mxu0 0
  %361 = vmatprep.subr.bf16.mxu0 0
  %362 = vmatpush2.bf16.msra.mxu0 0
  %363 = vmatprep.subr.bf16.mxu0 0
  %364 = vmatpush2.bf16.msra.mxu0 0
  %365 = vmatprep.subr.bf16.mxu0 0
  %366 = vmatpush2.bf16.msra.mxu0 0
  %367 = vmatprep.subr.bf16.mxu0 0
  %368 = vmatpush2.bf16.msra.mxu0 0
  %369 = vmatprep.subr.bf16.mxu0 0
  %370 = vmatpush2.bf16.msra.mxu0 0
  %371 = vmatprep.subr.bf16.mxu0 0
  %372 = vmatpush2.bf16.msra.mxu0 0
  %373 = vmatprep.mubr.bf16.mxu0 0
  %374 = vmatmul.mubr.bf16.gmra.mxu0 %v335
  %v375 = vpop.f32.mrf.mxu0
  %v376 = vadd.f32 0.0, %v375
  %v377 = vpop.f32.mrf.mxu0
  %v378 = vpop.f32.mrf.mxu0
  %v379 = vadd.f32 0.0, %v378
  %v380 = vpop.f32.mrf.mxu0
  %381 = vdwg.mxu0
  %v382 = vpack.c.bf16 %v379, %v376
  %v383 = vpack.c.bf16 %v328, %v327
  %v384 = vpack.c.bf16 %v330, %v329
  %v386 = vlaneseq
  %v387 = vshrl.u32 %v386, 7
  %v388 = vsub.s32 0, %v387
  %v389 = vrot.slane %v331, %v388
  %vm391 = vcmask 261120
  %v393 = vsel %vm391, %v382, 0
  %395 = vmatprep.subr.bf16.mxu0 0
  %396 = vmatpush1.bf16.msra.mxu0 0
  %397 = vmatprep.subr.bf16.mxu0 0
  %398 = vmatpush1.bf16.msra.mxu0 0
  %399 = vmatprep.subr.bf16.mxu0 0
  %400 = vmatpush1.bf16.msra.mxu0 0
  %401 = vmatprep.subr.bf16.mxu0 0
  %402 = vmatpush1.bf16.msra.mxu0 0
  %403 = vmatprep.subr.bf16.mxu0 0
  %404 = vmatpush1.bf16.msra.mxu0 0
  %405 = vmatprep.subr.bf16.mxu0 0
  %406 = vmatpush1.bf16.msra.mxu0 0
  %407 = vmatprep.subr.bf16.mxu0 0
  %408 = vmatpush1.bf16.msra.mxu0 %v384
  %409 = vmatprep.subr.bf16.mxu0 0
  %410 = vmatpush1.bf16.msra.mxu0 %v383
  %411 = vmatprep.subr.bf16.mxu0 0
  %412 = vmatpush2.bf16.msra.mxu0 0
  %413 = vmatprep.subr.bf16.mxu0 0
  %414 = vmatpush2.bf16.msra.mxu0 0
  %415 = vmatprep.subr.bf16.mxu0 0
  %416 = vmatpush2.bf16.msra.mxu0 0
  %417 = vmatprep.subr.bf16.mxu0 0
  %418 = vmatpush2.bf16.msra.mxu0 0
  %419 = vmatprep.subr.bf16.mxu0 0
  %420 = vmatpush2.bf16.msra.mxu0 0
  %421 = vmatprep.subr.bf16.mxu0 0
  %422 = vmatpush2.bf16.msra.mxu0 0
  %423 = vmatprep.subr.bf16.mxu0 0
  %424 = vmatpush2.bf16.msra.mxu0 0
  %425 = vmatprep.subr.bf16.mxu0 0
  %426 = vmatpush2.bf16.msra.mxu0 0
  %427 = vmatprep.mubr.bf16.mxu0 0
  %428 = vmatmul.mubr.bf16.gmra.mxu0 %v393
  %v429 = vpop.f32.mrf.mxu0
  %v430 = vadd.f32 %v389, %v429
  %v431 = vpop.f32.mrf.mxu0
  %v432 = vpop.f32.mrf.mxu0
  %v433 = vadd.f32 %v389, %v432
  %v434 = vpop.f32.mrf.mxu0
  %435 = vdwg.mxu0
  %v436 = vmax.f32 %v430, 0.0
  %v437 = vmax.f32 %v433, 0.0
  %438 = vst.msk [vmem:[%s8] sm:$0xff] %vm391, %v436
  %vm439 = vcmask 257024
  %440 = vst.msk [vmem:[%s8 + $0x8] sm:$0xf] %vm439, %v437
  %v441 = vld [vmem:[%s6] sm:$0x1]
  %v442 = vld [vmem:[#allocation2] sm:$0x1]
  %444 = vset.pattern.permute.xlu0 0
  %445 = vperm.xlu0 %444, %v442
  %v446 = vpop.permute.xlu0 %445
  %v448 = vlaneseq
  %v449 = vshrl.u32 %v448, 7
  %v450 = vsub.s32 0, %v449
  %v451 = vrot.slane %v446, %v450
  %v453 = vsel %vm391, %v441, 0
  %v456 = vsel %vm391, %v436, 0
  %v459 = vsel %vm391, %v437, 0
  %461 = vmatprep.subr.mxu0 0.0
  %462 = vmatpush1.xpose.msra.mxu0 0.0
  %463 = vmatprep.subr.mxu0 0.0
  %464 = vmatpush1.xpose.msra.mxu0 0.0
  %465 = vmatprep.subr.mxu0 0.0
  %466 = vmatpush1.xpose.msra.mxu0 0.0
  %467 = vmatprep.subr.mxu0 0.0
  %468 = vmatpush1.xpose.msra.mxu0 0.0
  %469 = vmatprep.subr.mxu0 0.0
  %470 = vmatpush1.xpose.msra.mxu0 0.0
  %471 = vmatprep.subr.mxu0 0.0
  %472 = vmatpush1.xpose.msra.mxu0 0.0
  %473 = vmatprep.subr.mxu0 0.0
  %474 = vmatpush1.xpose.msra.mxu0 0.0
  %475 = vmatprep.subr.mxu0 0.0
  %476 = vmatpush1.xpose.msra.mxu0 0.0
  %477 = vmatprep.subr.mxu0 0.0
  %478 = vmatpush1.xpose.msra.mxu0 0.0
  %479 = vmatprep.subr.mxu0 0.0
  %480 = vmatpush1.xpose.msra.mxu0 0.0
  %481 = vmatprep.subr.mxu0 0.0
  %482 = vmatpush1.xpose.msra.mxu0 0.0
  %483 = vmatprep.subr.mxu0 0.0
  %484 = vmatpush1.xpose.msra.mxu0 0.0
  %485 = vmatprep.subr.mxu0 0.0
  %486 = vmatpush1.xpose.msra.mxu0 0.0
  %487 = vmatprep.subr.mxu0 0.0
  %488 = vmatpush1.xpose.msra.mxu0 0.0
  %489 = vmatprep.subr.mxu0 0.0
  %490 = vmatpush1.xpose.msra.mxu0 %v459
  %491 = vmatprep.subr.mxu0 0.0
  %492 = vmatpush1.xpose.msra.mxu0 %v456
  %493 = vmatprep.subr.mxu0 0.0
  %494 = vmatpush2.xpose.msra.mxu0 0.0
  %495 = vmatprep.subr.mxu0 0.0
  %496 = vmatpush2.xpose.msra.mxu0 0.0
  %497 = vmatprep.subr.mxu0 0.0
  %498 = vmatpush2.xpose.msra.mxu0 0.0
  %499 = vmatprep.subr.mxu0 0.0
  %500 = vmatpush2.xpose.msra.mxu0 0.0
  %501 = vmatprep.subr.mxu0 0.0
  %502 = vmatpush2.xpose.msra.mxu0 0.0
  %503 = vmatprep.subr.mxu0 0.0
  %504 = vmatpush2.xpose.msra.mxu0 0.0
  %505 = vmatprep.subr.mxu0 0.0
  %506 = vmatpush2.xpose.msra.mxu0 0.0
  %507 = vmatprep.subr.mxu0 0.0
  %508 = vmatpush2.xpose.msra.mxu0 0.0
  %509 = vmatprep.subr.mxu0 0.0
  %510 = vmatpush2.xpose.msra.mxu0 0.0
  %511 = vmatprep.subr.mxu0 0.0
  %512 = vmatpush2.xpose.msra.mxu0 0.0
  %513 = vmatprep.subr.mxu0 0.0
  %514 = vmatpush2.xpose.msra.mxu0 0.0
  %515 = vmatprep.subr.mxu0 0.0
  %516 = vmatpush2.xpose.msra.mxu0 0.0
  %517 = vmatprep.subr.mxu0 0.0
  %518 = vmatpush2.xpose.msra.mxu0 0.0
  %519 = vmatprep.subr.mxu0 0.0
  %520 = vmatpush2.xpose.msra.mxu0 0.0
  %521 = vmatprep.subr.mxu0 0.0
  %522 = vmatpush2.xpose.msra.mxu0 0.0
  %523 = vmatprep.subr.mxu0 0.0
  %524 = vmatpush2.xpose.msra.mxu0 0.0
  %525 = vmatprep.mubr.f32.mxu0 0.0
  %526 = vmatmul.mubr.f32.gmra.mxu0 %v453
  %v527 = vpop.f32.mrf.mxu0
  %v528 = vadd.f32 %v451, %v527
  %v529 = vpop.f32.mrf.mxu0
  %530 = vdwg.mxu0
  %v531 = vsub.f32 0.0, %v528
  %v532 = vmul.f32 %v531, 1.442695
  %v533 = vpow.pop %v532
  %v534 = vadd.f32 %v533, 1.0
  %v535 = vrcp.pop %v534
  %vm536 = vcmask 90112
  %537 = vst.msk [vmem:[%s9] sm:$0x1] %vm536, %v535
  %vm538 = vcmp.ne.f32.partialorder %v214, 0.0
  %vm539 = vcmp.ne.f32.partialorder %v219, 0.0
  %v540 = vsel %vm538, 1, 0
  %v541 = vsel %vm539, 1, 0
  %v542 = vcvt.s32.f32 %v540
  %v543 = vcvt.s32.f32 %v541
  %v544 = vpack.c.bf16 %v543, %v542
  %v546 = vsel %vm222, %v544, 0
  %v548 = vsel %vm337, %v544, 0
  %550 = vmatprep.subr.bf16.mxu0 0
  %551 = vmatpush1.bf16.msra.mxu0 0
  %552 = vmatprep.subr.bf16.mxu0 0
  %553 = vmatpush1.bf16.msra.mxu0 0
  %554 = vmatprep.subr.bf16.mxu0 0
  %555 = vmatpush1.bf16.msra.mxu0 0
  %556 = vmatprep.subr.bf16.mxu0 0
  %557 = vmatpush1.bf16.msra.mxu0 0
  %558 = vmatprep.subr.bf16.mxu0 0
  %559 = vmatpush1.bf16.msra.mxu0 0
  %560 = vmatprep.subr.bf16.mxu0 0
  %561 = vmatpush1.bf16.msra.mxu0 0
  %562 = vmatprep.subr.bf16.mxu0 0
  %563 = vmatpush1.bf16.msra.mxu0 0
  %564 = vmatprep.subr.bf16.mxu0 0
  %565 = vmatpush1.bf16.msra.mxu0 %v548
  %566 = vmatprep.subr.bf16.mxu0 0
  %567 = vmatpush2.bf16.msra.mxu0 0
  %568 = vmatprep.subr.bf16.mxu0 0
  %569 = vmatpush2.bf16.msra.mxu0 0
  %570 = vmatprep.subr.bf16.mxu0 0
  %571 = vmatpush2.bf16.msra.mxu0 0
  %572 = vmatprep.subr.bf16.mxu0 0
  %573 = vmatpush2.bf16.msra.mxu0 0
  %574 = vmatprep.subr.bf16.mxu0 0
  %575 = vmatpush2.bf16.msra.mxu0 0
  %576 = vmatprep.subr.bf16.mxu0 0
  %577 = vmatpush2.bf16.msra.mxu0 0
  %578 = vmatprep.subr.bf16.mxu0 0
  %579 = vmatpush2.bf16.msra.mxu0 0
  %580 = vmatprep.subr.bf16.mxu0 0
  %581 = vmatpush2.bf16.msra.mxu0 0
  %582 = vmatprep.mubr.bf16.mxu0 0
  %583 = vmatmul.mubr.bf16.gmra.mxu0 %v546
  %v584 = vpop.f32.mrf.mxu0
  %v585 = vadd.f32 0.0, %v584
  %v586 = vpop.f32.mrf.mxu0
  %v587 = vpop.f32.mrf.mxu0
  %v588 = vadd.f32 0.0, %v587
  %v589 = vpop.f32.mrf.mxu0
  %590 = vdwg.mxu0
  %vm591 = vcmp.ne.f32.partialorder %v585, 0.0
  %vm592 = vcmp.ne.f32.partialorder %v588, 0.0
  %v593 = vsel %vm591, 1, 0
  %v594 = vsel %vm592, 1, 0
  %v595 = vcvt.s32.f32 %v593
  %v596 = vcvt.s32.f32 %v594
  %597 = vst.msk [vmem:[%s10] sm:$0xff] %vm222, %v595
  %598 = vst.msk [vmem:[%s10 + $0x8] sm:$0xf] %vm226, %v596
  // Predicated region
  $region34: #{_lambda_.6} parent=0 // pred_check
    _
  $region35: #{_lambda_.6} parent=0 // pred_check_branch
    %600 = sbr.rel (0) target = $region37
  $region36: #{_lambda_.6} parent=0 // pred_region
    _
  $region37: #{_lambda_.6} parent=0 // pred_fallthru
    _
  // Predicated region
  $region38: #{_lambda_.6} parent=0 // pred_check
    _
  $region39: #{_lambda_.6} parent=0 // pred_check_branch
    %602 = sbr.rel (0) target = $region41
  $region40: #{_lambda_.6} parent=0 // pred_region
    _
  $region41: #{_lambda_.6} parent=0 // pred_fallthru
    _
  // Predicated region
  $region42: #{_lambda_.6} parent=0 // pred_check
    _
  $region43: #{_lambda_.6} parent=0 // pred_check_branch
    %604 = sbr.rel (0) target = $region45
  $region44: #{_lambda_.6} parent=0 // pred_region
    _
  $region45: #{_lambda_.6} parent=0 // pred_fallthru
    _
  // Predicated region
  $region46: #{_lambda_.6} parent=0 // pred_check
    _
  $region47: #{_lambda_.6} parent=0 // pred_check_branch
    %606 = sbr.rel (0) target = $region49
  $region48: #{_lambda_.6} parent=0 // pred_region
    _
  $region49: #{_lambda_.6} parent=0 // pred_fallthru
    _
  // Predicated region
  $region50: #{_lambda_.6} parent=0 // pred_check
    _
  $region51: #{_lambda_.6} parent=0 // pred_check_branch
    %608 = sbr.rel (0) target = $region53
  $region52: #{_lambda_.6} parent=0 // pred_region
    _
  $region53: #{_lambda_.6} parent=0 // pred_fallthru
    _
  // Predicated region
  $region54: #{_lambda_.6} parent=0 // pred_check
    _
  $region55: #{_lambda_.6} parent=0 // pred_check_branch
    %610 = sbr.rel (0) target = $region57
  $region56: #{_lambda_.6} parent=0 // pred_region
    _
  $region57: #{_lambda_.6} parent=0 // pred_fallthru
    _
  // Predicated region
  $region58: #{_lambda_.6} parent=0 // pred_check
    _
  $region59: #{_lambda_.6} parent=0 // pred_check_branch
    %612 = sbr.rel (0) target = $region61
  $region60: #{_lambda_.6} parent=0 // pred_region
    _
  $region61: #{_lambda_.6} parent=0 // pred_fallthru
    _
  // Predicated region
  $region62: #{_lambda_.6} parent=0 // pred_check
    _
  $region63: #{_lambda_.6} parent=0 // pred_check_branch
    %614 = sbr.rel (0) target = $region65
  $region64: #{_lambda_.6} parent=0 // pred_region
    _
  $region65: #{_lambda_.6} parent=0 // pred_fallthru
    _
  // Predicated region
  $region66: #{_lambda_.6} parent=0 // pred_check
    _
  $region67: #{_lambda_.6} parent=0 // pred_check_branch
    %616 = sbr.rel (0) target = $region69
  $region68: #{_lambda_.6} parent=0 // pred_region
    _
  $region69: #{_lambda_.6} parent=0 // pred_fallthru
    _
  // Predicated region
  $region70: #{_lambda_.6} parent=0 // pred_check
    _
  $region71: #{_lambda_.6} parent=0 // pred_check_branch
    %618 = sbr.rel (0) target = $region73
  $region72: #{_lambda_.6} parent=0 // pred_region
    _
  $region73: #{_lambda_.6} parent=0 // pred_fallthru
    _

// kernel: _lambda_.7
$region0: #{_lambda_.7}
  #allocation0 [shape = 'u32[]', space=smem, size = 0x4, offset = 0x4, fixed_abs, tag = 'smem constant byte address 0x4 - core index']
  #allocation1 [shape = 'u32[144,128]{1,0:T(1,128)}', space=vmem, size = 0x12000, scoped, tag = 'internal scratch']
  %s0 = inlined_call_operand.vmem [shape: f32[12,12], index: 0, kind: input, shape index: {}]
  %s1 = inlined_call_operand.vmem [shape: f32[12,32], index: 1, kind: input, shape index: {}]
  %s2 = inlined_call_operand.vmem [shape: s32[7,1], index: 2, kind: input, shape index: {}]
  %s3 = inlined_call_operand.vmem [shape: f32[7,1], index: 3, kind: input, shape index: {}]
  %s4 = inlined_call_operand.vmem [shape: f32[32,32], index: 4, kind: input, shape index: {}]
  %s5 = inlined_call_operand.vmem [shape: f32[1,32], index: 5, kind: input, shape index: {}]
  %s6 = inlined_call_operand.vmem [shape: f32[7,32], index: 6, kind: output, shape index: {}]
  %s7 = sld [smem:[#allocation0]]
  $region34: #{_lambda_.7} parent=0
    _
  %s9 = ssub.s32 1, %s7
  %s10 = scalar_select 0, %s9, %s7
  // Predicated region
  $region2: #{_lambda_.7} parent=0 // pred_check
    _
  $region3: #{_lambda_.7} parent=0 // pred_check_branch
    %12 = sbr.rel (0) target = $region5
  $region4: #{_lambda_.7} parent=0 // pred_region
    _
  $region5: #{_lambda_.7} parent=0 // pred_fallthru
    _
  // Predicated region
  $region6: #{_lambda_.7} parent=0 // pred_check
    _
  $region7: #{_lambda_.7} parent=0 // pred_check_branch
    %14 = sbr.rel (0) target = $region9
  $region8: #{_lambda_.7} parent=0 // pred_region
    _
  $region9: #{_lambda_.7} parent=0 // pred_fallthru
    _
  // Predicated region
  $region10: #{_lambda_.7} parent=0 // pred_check
    _
  $region11: #{_lambda_.7} parent=0 // pred_check_branch
    %16 = sbr.rel (0) target = $region13
  $region12: #{_lambda_.7} parent=0 // pred_region
    _
  $region13: #{_lambda_.7} parent=0 // pred_fallthru
    _
  // Predicated region
  $region14: #{_lambda_.7} parent=0 // pred_check
    _
  $region15: #{_lambda_.7} parent=0 // pred_check_branch
    %18 = sbr.rel (0) target = $region17
  $region16: #{_lambda_.7} parent=0 // pred_region
    _
  $region17: #{_lambda_.7} parent=0 // pred_fallthru
    _
  // Predicated region
  $region18: #{_lambda_.7} parent=0 // pred_check
    _
  $region19: #{_lambda_.7} parent=0 // pred_check_branch
    %20 = sbr.rel (0) target = $region21
  $region20: #{_lambda_.7} parent=0 // pred_region
    _
  $region21: #{_lambda_.7} parent=0 // pred_fallthru
    _
  // Predicated region
  $region22: #{_lambda_.7} parent=0 // pred_check
    _
  $region23: #{_lambda_.7} parent=0 // pred_check_branch
    %22 = sbr.rel (0) target = $region25
  $region24: #{_lambda_.7} parent=0 // pred_region
    _
  $region25: #{_lambda_.7} parent=0 // pred_fallthru
    _
  %v24 = vld [vmem:[%s0] sm:$0xff]
  %v25 = vld [vmem:[%s0 + $0x8] sm:$0xf]
  %v26 = vld [vmem:[%s1] sm:$0xff]
  %v27 = vld [vmem:[%s1 + $0x8] sm:$0xf]
  %v28 = vld [vmem:[%s2] sm:$0x7f]
  %v29 = vld [vmem:[%s3] sm:$0x7f]
  %v30 = vlaneseq
  %v31 = vand.u32 %v30, 127
  %32 = vset.pattern.permute.xlu0 0
  %33 = vperm.xlu0 %32, %v28
  %v34 = vpop.permute.xlu0 %33
  %vm35 = vcmp.eq.s32.totalorder %v31, %v34
  %v36 = vsel %vm35, 1, 0
  %v37 = vcvt.s32.f32 %v36
  %vm38 = vcmask 97280
  %v40 = vsel %vm38, %v37, 0
  %vm42 = vcmask 1043456
  %v44 = vsel %vm42, %v25, 0
  %46 = vmatprep.subr.mxu0 0.0
  %47 = vmatpush1.msra.mxu0 0.0
  %48 = vmatprep.subr.mxu0 0.0
  %49 = vmatpush1.msra.mxu0 0.0
  %50 = vmatprep.subr.mxu0 0.0
  %51 = vmatpush1.msra.mxu0 0.0
  %52 = vmatprep.subr.mxu0 0.0
  %53 = vmatpush1.msra.mxu0 0.0
  %54 = vmatprep.subr.mxu0 0.0
  %55 = vmatpush1.msra.mxu0 0.0
  %56 = vmatprep.subr.mxu0 0.0
  %57 = vmatpush1.msra.mxu0 0.0
  %58 = vmatprep.subr.mxu0 0.0
  %59 = vmatpush1.msra.mxu0 0.0
  %60 = vmatprep.subr.mxu0 0.0
  %61 = vmatpush1.msra.mxu0 0.0
  %62 = vmatprep.subr.mxu0 0.0
  %63 = vmatpush1.msra.mxu0 0.0
  %64 = vmatprep.subr.mxu0 0.0
  %65 = vmatpush1.msra.mxu0 0.0
  %66 = vmatprep.subr.mxu0 0.0
  %67 = vmatpush1.msra.mxu0 0.0
  %68 = vmatprep.subr.mxu0 0.0
  %69 = vmatpush1.msra.mxu0 0.0
  %70 = vmatprep.subr.mxu0 0.0
  %71 = vmatpush1.msra.mxu0 0.0
  %72 = vmatprep.subr.mxu0 0.0
  %73 = vmatpush1.msra.mxu0 0.0
  %74 = vmatprep.subr.mxu0 0.0
  %75 = vmatpush1.msra.mxu0 %v44
  %76 = vmatprep.subr.mxu0 0.0
  %77 = vmatpush1.msra.mxu0 %v24
  %78 = vmatprep.subr.mxu0 0.0
  %79 = vmatpush2.msra.mxu0 0.0
  %80 = vmatprep.subr.mxu0 0.0
  %81 = vmatpush2.msra.mxu0 0.0
  %82 = vmatprep.subr.mxu0 0.0
  %83 = vmatpush2.msra.mxu0 0.0
  %84 = vmatprep.subr.mxu0 0.0
  %85 = vmatpush2.msra.mxu0 0.0
  %86 = vmatprep.subr.mxu0 0.0
  %87 = vmatpush2.msra.mxu0 0.0
  %88 = vmatprep.subr.mxu0 0.0
  %89 = vmatpush2.msra.mxu0 0.0
  %90 = vmatprep.subr.mxu0 0.0
  %91 = vmatpush2.msra.mxu0 0.0
  %92 = vmatprep.subr.mxu0 0.0
  %93 = vmatpush2.msra.mxu0 0.0
  %94 = vmatprep.subr.mxu0 0.0
  %95 = vmatpush2.msra.mxu0 0.0
  %96 = vmatprep.subr.mxu0 0.0
  %97 = vmatpush2.msra.mxu0 0.0
  %98 = vmatprep.subr.mxu0 0.0
  %99 = vmatpush2.msra.mxu0 0.0
  %100 = vmatprep.subr.mxu0 0.0
  %101 = vmatpush2.msra.mxu0 0.0
  %102 = vmatprep.subr.mxu0 0.0
  %103 = vmatpush2.msra.mxu0 0.0
  %104 = vmatprep.subr.mxu0 0.0
  %105 = vmatpush2.msra.mxu0 0.0
  %106 = vmatprep.subr.mxu0 0.0
  %107 = vmatpush2.msra.mxu0 0.0
  %108 = vmatprep.subr.mxu0 0.0
  %109 = vmatpush2.msra.mxu0 0.0
  %110 = vmatprep.mubr.f32.mxu0 0.0
  %111 = vmatmul.mubr.f32.gmra.mxu0 %v40
  %v112 = vpop.f32.mrf.mxu0
  %v113 = vadd.f32 0.0, %v112
  %v114 = vpop.f32.mrf.mxu0
  %115 = vdwg.mxu0
  %v117 = vsel %vm38, %v113, 0
  %119 = vmatprep.subr.mxu0 0.0
  %120 = vmatpush1.xpose.msra.mxu0 0.0
  %121 = vmatprep.subr.mxu0 0.0
  %122 = vmatpush1.xpose.msra.mxu0 0.0
  %123 = vmatprep.subr.mxu0 0.0
  %124 = vmatpush1.xpose.msra.mxu0 0.0
  %125 = vmatprep.subr.mxu0 0.0
  %126 = vmatpush1.xpose.msra.mxu0 0.0
  %127 = vmatprep.subr.mxu0 0.0
  %128 = vmatpush1.xpose.msra.mxu0 0.0
  %129 = vmatprep.subr.mxu0 0.0
  %130 = vmatpush1.xpose.msra.mxu0 0.0
  %131 = vmatprep.subr.mxu0 0.0
  %132 = vmatpush1.xpose.msra.mxu0 0.0
  %133 = vmatprep.subr.mxu0 0.0
  %134 = vmatpush1.xpose.msra.mxu0 0.0
  %135 = vmatprep.subr.mxu0 0.0
  %136 = vmatpush1.xpose.msra.mxu0 0.0
  %137 = vmatprep.subr.mxu0 0.0
  %138 = vmatpush1.xpose.msra.mxu0 0.0
  %139 = vmatprep.subr.mxu0 0.0
  %140 = vmatpush1.xpose.msra.mxu0 0.0
  %141 = vmatprep.subr.mxu0 0.0
  %142 = vmatpush1.xpose.msra.mxu0 0.0
  %143 = vmatprep.subr.mxu0 0.0
  %144 = vmatpush1.xpose.msra.mxu0 0.0
  %145 = vmatprep.subr.mxu0 0.0
  %146 = vmatpush1.xpose.msra.mxu0 0.0
  %147 = vmatprep.subr.mxu0 0.0
  %148 = vmatpush1.xpose.msra.mxu0 0.0
  %149 = vmatprep.subr.mxu0 0.0
  %150 = vmatpush1.xpose.msra.mxu0 %v40
  %151 = vmatprep.subr.mxu0 0.0
  %152 = vmatpush2.xpose.msra.mxu0 0.0
  %153 = vmatprep.subr.mxu0 0.0
  %154 = vmatpush2.xpose.msra.mxu0 0.0
  %155 = vmatprep.subr.mxu0 0.0
  %156 = vmatpush2.xpose.msra.mxu0 0.0
  %157 = vmatprep.subr.mxu0 0.0
  %158 = vmatpush2.xpose.msra.mxu0 0.0
  %159 = vmatprep.subr.mxu0 0.0
  %160 = vmatpush2.xpose.msra.mxu0 0.0
  %161 = vmatprep.subr.mxu0 0.0
  %162 = vmatpush2.xpose.msra.mxu0 0.0
  %163 = vmatprep.subr.mxu0 0.0
  %164 = vmatpush2.xpose.msra.mxu0 0.0
  %165 = vmatprep.subr.mxu0 0.0
  %166 = vmatpush2.xpose.msra.mxu0 0.0
  %167 = vmatprep.subr.mxu0 0.0
  %168 = vmatpush2.xpose.msra.mxu0 0.0
  %169 = vmatprep.subr.mxu0 0.0
  %170 = vmatpush2.xpose.msra.mxu0 0.0
  %171 = vmatprep.subr.mxu0 0.0
  %172 = vmatpush2.xpose.msra.mxu0 0.0
  %173 = vmatprep.subr.mxu0 0.0
  %174 = vmatpush2.xpose.msra.mxu0 0.0
  %175 = vmatprep.subr.mxu0 0.0
  %176 = vmatpush2.xpose.msra.mxu0 0.0
  %177 = vmatprep.subr.mxu0 0.0
  %178 = vmatpush2.xpose.msra.mxu0 0.0
  %179 = vmatprep.subr.mxu0 0.0
  %180 = vmatpush2.xpose.msra.mxu0 0.0
  %181 = vmatprep.subr.mxu0 0.0
  %182 = vmatpush2.xpose.msra.mxu0 0.0
  %183 = vmatprep.mubr.f32.mxu0 0.0
  %184 = vmatmul.mubr.f32.gmra.mxu0 %v117
  %v185 = vpop.f32.mrf.mxu0
  %v186 = vadd.f32 0.0, %v185
  %v187 = vpop.f32.mrf.mxu0
  %188 = vdwg.mxu0
  %vm189 = vcmask 55296
  %v190 = vsel %vm189, %v186, 0.0
  %191 = vadd.xlane.f32.xlu0 %v190
  %v192 = vpop.xlane.xlu0 %191
  %v194 = vsel %vm42, %v27, 0
  %196 = vmatprep.subr.mxu0 0.0
  %197 = vmatpush1.msra.mxu0 0.0
  %198 = vmatprep.subr.mxu0 0.0
  %199 = vmatpush1.msra.mxu0 0.0
  %200 = vmatprep.subr.mxu0 0.0
  %201 = vmatpush1.msra.mxu0 0.0
  %202 = vmatprep.subr.mxu0 0.0
  %203 = vmatpush1.msra.mxu0 0.0
  %204 = vmatprep.subr.mxu0 0.0
  %205 = vmatpush1.msra.mxu0 0.0
  %206 = vmatprep.subr.mxu0 0.0
  %207 = vmatpush1.msra.mxu0 0.0
  %208 = vmatprep.subr.mxu0 0.0
  %209 = vmatpush1.msra.mxu0 0.0
  %210 = vmatprep.subr.mxu0 0.0
  %211 = vmatpush1.msra.mxu0 0.0
  %212 = vmatprep.subr.mxu0 0.0
  %213 = vmatpush1.msra.mxu0 0.0
  %214 = vmatprep.subr.mxu0 0.0
  %215 = vmatpush1.msra.mxu0 0.0
  %216 = vmatprep.subr.mxu0 0.0
  %217 = vmatpush1.msra.mxu0 0.0
  %218 = vmatprep.subr.mxu0 0.0
  %219 = vmatpush1.msra.mxu0 0.0
  %220 = vmatprep.subr.mxu0 0.0
  %221 = vmatpush1.msra.mxu0 0.0
  %222 = vmatprep.subr.mxu0 0.0
  %223 = vmatpush1.msra.mxu0 0.0
  %224 = vmatprep.subr.mxu0 0.0
  %225 = vmatpush1.msra.mxu0 %v194
  %226 = vmatprep.subr.mxu0 0.0
  %227 = vmatpush1.msra.mxu0 %v26
  %228 = vmatprep.subr.mxu0 0.0
  %229 = vmatpush2.msra.mxu0 0.0
  %230 = vmatprep.subr.mxu0 0.0
  %231 = vmatpush2.msra.mxu0 0.0
  %232 = vmatprep.subr.mxu0 0.0
  %233 = vmatpush2.msra.mxu0 0.0
  %234 = vmatprep.subr.mxu0 0.0
  %235 = vmatpush2.msra.mxu0 0.0
  %236 = vmatprep.subr.mxu0 0.0
  %237 = vmatpush2.msra.mxu0 0.0
  %238 = vmatprep.subr.mxu0 0.0
  %239 = vmatpush2.msra.mxu0 0.0
  %240 = vmatprep.subr.mxu0 0.0
  %241 = vmatpush2.msra.mxu0 0.0
  %242 = vmatprep.subr.mxu0 0.0
  %243 = vmatpush2.msra.mxu0 0.0
  %244 = vmatprep.subr.mxu0 0.0
  %245 = vmatpush2.msra.mxu0 0.0
  %246 = vmatprep.subr.mxu0 0.0
  %247 = vmatpush2.msra.mxu0 0.0
  %248 = vmatprep.subr.mxu0 0.0
  %249 = vmatpush2.msra.mxu0 0.0
  %250 = vmatprep.subr.mxu0 0.0
  %251 = vmatpush2.msra.mxu0 0.0
  %252 = vmatprep.subr.mxu0 0.0
  %253 = vmatpush2.msra.mxu0 0.0
  %254 = vmatprep.subr.mxu0 0.0
  %255 = vmatpush2.msra.mxu0 0.0
  %256 = vmatprep.subr.mxu0 0.0
  %257 = vmatpush2.msra.mxu0 0.0
  %258 = vmatprep.subr.mxu0 0.0
  %259 = vmatpush2.msra.mxu0 0.0
  %260 = vmatprep.mubr.f32.mxu0 0.0
  %261 = vmatmul.mubr.f32.gmra.mxu0 %v40
  %v262 = vpop.f32.mrf.mxu0
  %v263 = vadd.f32 0.0, %v262
  %v264 = vpop.f32.mrf.mxu0
  %265 = vdwg.mxu0
  %v266 = vrcp.pop %v192
  %v267 = vmul.f32 %v29, %v266
  %269 = vset.pattern.permute.xlu0 0
  %270 = vperm.xlu0 %269, %v267
  %v271 = vpop.permute.xlu0 %270
  %v273 = vmul.f32 %v263, %v271
  %v274 = vld [vmem:[%s4] sm:$0xff]
  %v275 = vld [vmem:[%s4 + $0x8] sm:$0xff]
  %v276 = vld [vmem:[%s4 + $0x10] sm:$0xff]
  %v277 = vld [vmem:[%s4 + $0x18] sm:$0xff]
  %v278 = vld [vmem:[%s5] sm:$0x1]
  %v279 = vpack.c.bf16 %v186, %v186
  %v280 = vpack.c.bf16 %v273, %v273
  %vm281 = vcmask 56320
  %v283 = vsel %vm281, %v279, 0
  %vm285 = vcmask 1042432
  %v286 = vsel %vm285, 4294967295, 65535
  %v287 = vsel %vm42, %v286, 0
  %v289 = vand.u32 %v280, %v287
  %291 = vmatprep.subr.bf16.mxu0 0
  %292 = vmatpush1.bf16.msra.mxu0 0
  %293 = vmatprep.subr.bf16.mxu0 0
  %294 = vmatpush1.bf16.msra.mxu0 0
  %295 = vmatprep.subr.bf16.mxu0 0
  %296 = vmatpush1.bf16.msra.mxu0 0
  %297 = vmatprep.subr.bf16.mxu0 0
  %298 = vmatpush1.bf16.msra.mxu0 0
  %299 = vmatprep.subr.bf16.mxu0 0
  %300 = vmatpush1.bf16.msra.mxu0 0
  %301 = vmatprep.subr.bf16.mxu0 0
  %302 = vmatpush1.bf16.msra.mxu0 0
  %303 = vmatprep.subr.bf16.mxu0 0
  %304 = vmatpush1.bf16.msra.mxu0 0
  %305 = vmatprep.subr.bf16.mxu0 0
  %306 = vmatpush1.bf16.msra.mxu0 %v289
  %307 = vmatprep.subr.bf16.mxu0 0
  %308 = vmatpush2.bf16.msra.mxu0 0
  %309 = vmatprep.subr.bf16.mxu0 0
  %310 = vmatpush2.bf16.msra.mxu0 0
  %311 = vmatprep.subr.bf16.mxu0 0
  %312 = vmatpush2.bf16.msra.mxu0 0
  %313 = vmatprep.subr.bf16.mxu0 0
  %314 = vmatpush2.bf16.msra.mxu0 0
  %315 = vmatprep.subr.bf16.mxu0 0
  %316 = vmatpush2.bf16.msra.mxu0 0
  %317 = vmatprep.subr.bf16.mxu0 0
  %318 = vmatpush2.bf16.msra.mxu0 0
  %319 = vmatprep.subr.bf16.mxu0 0
  %320 = vmatpush2.bf16.msra.mxu0 0
  %321 = vmatprep.subr.bf16.mxu0 0
  %322 = vmatpush2.bf16.msra.mxu0 0
  %323 = vmatprep.mubr.bf16.mxu0 0
  %324 = vmatmul.mubr.bf16.gmra.mxu0 %v283
  %v325 = vpop.f32.mrf.mxu0
  %v326 = vadd.f32 0.0, %v325
  %v327 = vpop.f32.mrf.mxu0
  %v328 = vpop.f32.mrf.mxu0
  %v329 = vpop.f32.mrf.mxu0
  %330 = vdwg.mxu0
  %v331 = vpack.c.bf16 %v326, %v326
  %v332 = vpack.c.bf16 %v275, %v274
  %v333 = vpack.c.bf16 %v277, %v276
  %v335 = vlaneseq
  %v336 = vshrl.u32 %v335, 7
  %v337 = vsub.s32 0, %v336
  %v338 = vrot.slane %v278, %v337
  %vm340 = vcmask 261120
  %v342 = vsel %vm340, %v331, 0
  %344 = vmatprep.subr.bf16.mxu0 0
  %345 = vmatpush1.bf16.msra.mxu0 0
  %346 = vmatprep.subr.bf16.mxu0 0
  %347 = vmatpush1.bf16.msra.mxu0 0
  %348 = vmatprep.subr.bf16.mxu0 0
  %349 = vmatpush1.bf16.msra.mxu0 0
  %350 = vmatprep.subr.bf16.mxu0 0
  %351 = vmatpush1.bf16.msra.mxu0 0
  %352 = vmatprep.subr.bf16.mxu0 0
  %353 = vmatpush1.bf16.msra.mxu0 0
  %354 = vmatprep.subr.bf16.mxu0 0
  %355 = vmatpush1.bf16.msra.mxu0 0
  %356 = vmatprep.subr.bf16.mxu0 0
  %357 = vmatpush1.bf16.msra.mxu0 %v333
  %358 = vmatprep.subr.bf16.mxu0 0
  %359 = vmatpush1.bf16.msra.mxu0 %v332
  %360 = vmatprep.subr.bf16.mxu0 0
  %361 = vmatpush2.bf16.msra.mxu0 0
  %362 = vmatprep.subr.bf16.mxu0 0
  %363 = vmatpush2.bf16.msra.mxu0 0
  %364 = vmatprep.subr.bf16.mxu0 0
  %365 = vmatpush2.bf16.msra.mxu0 0
  %366 = vmatprep.subr.bf16.mxu0 0
  %367 = vmatpush2.bf16.msra.mxu0 0
  %368 = vmatprep.subr.bf16.mxu0 0
  %369 = vmatpush2.bf16.msra.mxu0 0
  %370 = vmatprep.subr.bf16.mxu0 0
  %371 = vmatpush2.bf16.msra.mxu0 0
  %372 = vmatprep.subr.bf16.mxu0 0
  %373 = vmatpush2.bf16.msra.mxu0 0
  %374 = vmatprep.subr.bf16.mxu0 0
  %375 = vmatpush2.bf16.msra.mxu0 0
  %376 = vmatprep.mubr.bf16.mxu0 0
  %377 = vmatmul.mubr.bf16.gmra.mxu0 %v342
  %v378 = vpop.f32.mrf.mxu0
  %v379 = vadd.f32 %v338, %v378
  %v380 = vpop.f32.mrf.mxu0
  %v381 = vpop.f32.mrf.mxu0
  %v382 = vpop.f32.mrf.mxu0
  %383 = vdwg.mxu0
  %v384 = vmax.f32 %v379, 0.0
  %vm385 = vcmask 260096
  %386 = vst.msk [vmem:[%s6] sm:$0x7f] %vm385, %v384
  // Predicated region
  $region26: #{_lambda_.7} parent=0 // pred_check
    _
  $region27: #{_lambda_.7} parent=0 // pred_check_branch
    %388 = sbr.rel (0) target = $region29
  $region28: #{_lambda_.7} parent=0 // pred_region
    _
  $region29: #{_lambda_.7} parent=0 // pred_fallthru
    _
  // Predicated region
  $region30: #{_lambda_.7} parent=0 // pred_check
    _
  $region31: #{_lambda_.7} parent=0 // pred_check_branch
    %390 = sbr.rel (0) target = $region33
  $region32: #{_lambda_.7} parent=0 // pred_region
    _
  $region33: #{_lambda_.7} parent=0 // pred_fallthru
    _

// kernel: _lambda_.9
$region0: #{_lambda_.9}
  #allocation0 [shape = 'u32[]', space=smem, size = 0x4, offset = 0x4, fixed_abs, tag = 'smem constant byte address 0x4 - core index']
  #allocation1 [shape = 'u32[144,128]{1,0:T(1,128)}', space=vmem, size = 0x12000, scoped, tag = 'internal scratch']
  %s0 = inlined_call_operand.vmem [shape: f32[16,16], index: 0, kind: input, shape index: {}]
  %s1 = inlined_call_operand.vmem [shape: f32[16,1], index: 1, kind: input, shape index: {}]
  %s2 = inlined_call_operand.vmem [shape: s32[1,12], index: 2, kind: input, shape index: {}]
  %s3 = inlined_call_operand.vmem [shape: f32[12,32], index: 3, kind: input, shape index: {}]
  %s4 = inlined_call_operand.vmem [shape: f32[32,32], index: 4, kind: input, shape index: {}]
  %s5 = inlined_call_operand.vmem [shape: f32[1,32], index: 5, kind: input, shape index: {}]
  %s6 = inlined_call_operand.vmem [shape: f32[16,32], index: 6, kind: input, shape index: {}]
  %s7 = inlined_call_operand.vmem [shape: f32[16,32], index: 7, kind: input, shape index: {}]
  %s8 = inlined_call_operand.hbm [shape: f32[16,32], index: 8, kind: output, shape index: {0}]
  %s9 = inlined_call_operand.hbm [shape: f32[16,32], index: 9, kind: output, shape index: {1}]
  %10 = xla_tuple %s8, %s9
  %s11 = sld [smem:[#allocation0]]
  $region50: #{_lambda_.9} parent=0
    _
  %s13 = ssub.s32 1, %s11
  %s14 = scalar_select 0, %s13, %s11
  $region1: #{_lambda_.9} parent=0
    #allocation2 [shape = 'u8[8192]{0}', space=vmem, size = 0x2000, scoped, tag = 'output window, operand 0, single buffered']
    #allocation3 [shape = 's32[1]{0}', space=sflag, size = 0x4, scoped, tag = 'scoped memory for _lambda_.9']
    #allocation4 [shape = 'u8[8192]{0}', space=vmem, size = 0x2000, scoped, tag = 'output window, operand 1, single buffered']
    #allocation5 [shape = 's32[1]{0}', space=sflag, size = 0x4, scoped, tag = 'scoped memory for _lambda_.9']
    %15 = vsyncpa [#allocation3], 0
    %16 = vsyncpa [#allocation5], 0
    // Predicated region
    $region2: #{_lambda_.9} parent=1 // pred_check
      _
    $region3: #{_lambda_.9} parent=1 // pred_check_branch
      %18 = sbr.rel (0) target = $region5
    $region4: #{_lambda_.9} parent=1 // pred_region
      _
    $region5: #{_lambda_.9} parent=1 // pred_fallthru
      _
    // Predicated region
    $region6: #{_lambda_.9} parent=1 // pred_check
      _
    $region7: #{_lambda_.9} parent=1 // pred_check_branch
      %20 = sbr.rel (0) target = $region9
    $region8: #{_lambda_.9} parent=1 // pred_region
      _
    $region9: #{_lambda_.9} parent=1 // pred_fallthru
      _
    // Predicated region
    $region10: #{_lambda_.9} parent=1 // pred_check
      _
    $region11: #{_lambda_.9} parent=1 // pred_check_branch
      %22 = sbr.rel (0) target = $region13
    $region12: #{_lambda_.9} parent=1 // pred_region
      _
    $region13: #{_lambda_.9} parent=1 // pred_fallthru
      _
    // Predicated region
    $region14: #{_lambda_.9} parent=1 // pred_check
      _
    $region15: #{_lambda_.9} parent=1 // pred_check_branch
      %24 = sbr.rel (0) target = $region17
    $region16: #{_lambda_.9} parent=1 // pred_region
      _
    $region17: #{_lambda_.9} parent=1 // pred_fallthru
      _
    // Predicated region
    $region18: #{_lambda_.9} parent=1 // pred_check
      _
    $region19: #{_lambda_.9} parent=1 // pred_check_branch
      %26 = sbr.rel (0) target = $region21
    $region20: #{_lambda_.9} parent=1 // pred_region
      _
    $region21: #{_lambda_.9} parent=1 // pred_fallthru
      _
    // Predicated region
    $region22: #{_lambda_.9} parent=1 // pred_check
      _
    $region23: #{_lambda_.9} parent=1 // pred_check_branch
      %28 = sbr.rel (0) target = $region25
    $region24: #{_lambda_.9} parent=1 // pred_region
      _
    $region25: #{_lambda_.9} parent=1 // pred_fallthru
      _
    // Predicated region
    $region26: #{_lambda_.9} parent=1 // pred_check
      _
    $region27: #{_lambda_.9} parent=1 // pred_check_branch
      %30 = sbr.rel (0) target = $region29
    $region28: #{_lambda_.9} parent=1 // pred_region
      _
    $region29: #{_lambda_.9} parent=1 // pred_fallthru
      _
    // Predicated region
    $region30: #{_lambda_.9} parent=1 // pred_check
      _
    $region31: #{_lambda_.9} parent=1 // pred_check_branch
      %32 = sbr.rel (0) target = $region33
    $region32: #{_lambda_.9} parent=1 // pred_region
      _
    $region33: #{_lambda_.9} parent=1 // pred_fallthru
      _
    %v34 = vld [vmem:[%s2] sm:$0x1]
    %v35 = vlaneseq
    %v36 = vshrl.u32 %v35, 7
    %v37 = vadd.s32 %v36, 8
    %v38 = vlaneseq
    %v39 = vshrl.u32 %v38, 7
    %v40 = vsub.s32 0, %v39
    %v41 = vrot.slane %v34, %v40
    %vm42 = vcmp.eq.s32.totalorder %v36, %v41
    %vm43 = vcmp.eq.s32.totalorder %v37, %v41
    %v44 = vsel %vm42, 1, 0
    %v45 = vsel %vm43, 1, 0
    %v46 = vcvt.s32.f32 %v44
    %v47 = vcvt.s32.f32 %v45
    %v48 = vld [vmem:[%s3] sm:$0xff]
    %v49 = vld [vmem:[%s3 + $0x8] sm:$0xf]
    %vm50 = vcmask 97280
    %v52 = vsel %vm50, %v46, 0
    %v55 = vsel %vm50, %v47, 0
    %vm57 = vcmask 1043456
    %v59 = vsel %vm57, %v49, 0
    %61 = vmatprep.subr.mxu0 0.0
    %62 = vmatpush1.msra.mxu0 0.0
    %63 = vmatprep.subr.mxu0 0.0
    %64 = vmatpush1.msra.mxu0 0.0
    %65 = vmatprep.subr.mxu0 0.0
    %66 = vmatpush1.msra.mxu0 0.0
    %67 = vmatprep.subr.mxu0 0.0
    %68 = vmatpush1.msra.mxu0 0.0
    %69 = vmatprep.subr.mxu0 0.0
    %70 = vmatpush1.msra.mxu0 0.0
    %71 = vmatprep.subr.mxu0 0.0
    %72 = vmatpush1.msra.mxu0 0.0
    %73 = vmatprep.subr.mxu0 0.0
    %74 = vmatpush1.msra.mxu0 0.0
    %75 = vmatprep.subr.mxu0 0.0
    %76 = vmatpush1.msra.mxu0 0.0
    %77 = vmatprep.subr.mxu0 0.0
    %78 = vmatpush1.msra.mxu0 0.0
    %79 = vmatprep.subr.mxu0 0.0
    %80 = vmatpush1.msra.mxu0 0.0
    %81 = vmatprep.subr.mxu0 0.0
    %82 = vmatpush1.msra.mxu0 0.0
    %83 = vmatprep.subr.mxu0 0.0
    %84 = vmatpush1.msra.mxu0 0.0
    %85 = vmatprep.subr.mxu0 0.0
    %86 = vmatpush1.msra.mxu0 0.0
    %87 = vmatprep.subr.mxu0 0.0
    %88 = vmatpush1.msra.mxu0 0.0
    %89 = vmatprep.subr.mxu0 0.0
    %90 = vmatpush1.msra.mxu0 %v59
    %91 = vmatprep.subr.mxu0 0.0
    %92 = vmatpush1.msra.mxu0 %v48
    %93 = vmatprep.subr.mxu0 0.0
    %94 = vmatpush2.msra.mxu0 0.0
    %95 = vmatprep.subr.mxu0 0.0
    %96 = vmatpush2.msra.mxu0 0.0
    %97 = vmatprep.subr.mxu0 0.0
    %98 = vmatpush2.msra.mxu0 0.0
    %99 = vmatprep.subr.mxu0 0.0
    %100 = vmatpush2.msra.mxu0 0.0
    %101 = vmatprep.subr.mxu0 0.0
    %102 = vmatpush2.msra.mxu0 0.0
    %103 = vmatprep.subr.mxu0 0.0
    %104 = vmatpush2.msra.mxu0 0.0
    %105 = vmatprep.subr.mxu0 0.0
    %106 = vmatpush2.msra.mxu0 0.0
    %107 = vmatprep.subr.mxu0 0.0
    %108 = vmatpush2.msra.mxu0 0.0
    %109 = vmatprep.subr.mxu0 0.0
    %110 = vmatpush2.msra.mxu0 0.0
    %111 = vmatprep.subr.mxu0 0.0
    %112 = vmatpush2.msra.mxu0 0.0
    %113 = vmatprep.subr.mxu0 0.0
    %114 = vmatpush2.msra.mxu0 0.0
    %115 = vmatprep.subr.mxu0 0.0
    %116 = vmatpush2.msra.mxu0 0.0
    %117 = vmatprep.subr.mxu0 0.0
    %118 = vmatpush2.msra.mxu0 0.0
    %119 = vmatprep.subr.mxu0 0.0
    %120 = vmatpush2.msra.mxu0 0.0
    %121 = vmatprep.subr.mxu0 0.0
    %122 = vmatpush2.msra.mxu0 0.0
    %123 = vmatprep.subr.mxu0 0.0
    %124 = vmatpush2.msra.mxu0 0.0
    %125 = vmatprep.mubr.f32.mxu0 0.0
    %126 = vmatmul.mubr.f32.gmra.mxu0 %v52
    %v127 = vpop.f32.mrf.mxu0
    %v128 = vadd.f32 0.0, %v127
    %v129 = vpop.f32.mrf.mxu0
    %130 = vmatprep.mubr.f32.mxu0 0.0
    %131 = vmatmul.mubr.f32.gmra.mxu0 %v55
    %v132 = vpop.f32.mrf.mxu0
    %v133 = vadd.f32 0.0, %v132
    %v134 = vpop.f32.mrf.mxu0
    %135 = vdwg.mxu0
    %v136 = vld [vmem:[%s1] sm:$0xff]
    %v137 = vld [vmem:[%s1 + $0x8] sm:$0xff]
    %139 = vset.pattern.permute.xlu0 0
    %140 = vperm.xlu0 %139, %v136
    %v141 = vpop.permute.xlu0 %140
    %144 = vset.pattern.permute.xlu0 0
    %145 = vperm.xlu0 %144, %v137
    %v146 = vpop.permute.xlu0 %145
    %v148 = vrcp.pop %v141
    %v149 = vmul.f32 %v128, %v148
    %v150 = vrcp.pop %v146
    %v151 = vmul.f32 %v133, %v150
    %v152 = vld [vmem:[%s0] sm:$0xff]
    %v153 = vld [vmem:[%s0 + $0x8] sm:$0xff]
    %v154 = vld [vmem:[%s4] sm:$0xff]
    %v155 = vld [vmem:[%s4 + $0x8] sm:$0xff]
    %v156 = vld [vmem:[%s4 + $0x10] sm:$0xff]
    %v157 = vld [vmem:[%s4 + $0x18] sm:$0xff]
    %v158 = vld [vmem:[%s5] sm:$0x1]
    %v159 = vpack.c.bf16 %v153, %v152
    %v160 = vpack.c.bf16 %v151, %v149
    %vm161 = vcmask 130048
    %v163 = vsel %vm161, %v159, 0
    %165 = vmatprep.subr.bf16.mxu0 0
    %166 = vmatpush1.bf16.msra.mxu0 0
    %167 = vmatprep.subr.bf16.mxu0 0
    %168 = vmatpush1.bf16.msra.mxu0 0
    %169 = vmatprep.subr.bf16.mxu0 0
    %170 = vmatpush1.bf16.msra.mxu0 0
    %171 = vmatprep.subr.bf16.mxu0 0
    %172 = vmatpush1.bf16.msra.mxu0 0
    %173 = vmatprep.subr.bf16.mxu0 0
    %174 = vmatpush1.bf16.msra.mxu0 0
    %175 = vmatprep.subr.bf16.mxu0 0
    %176 = vmatpush1.bf16.msra.mxu0 0
    %177 = vmatprep.subr.bf16.mxu0 0
    %178 = vmatpush1.bf16.msra.mxu0 0
    %179 = vmatprep.subr.bf16.mxu0 0
    %180 = vmatpush1.bf16.msra.mxu0 %v160
    %181 = vmatprep.subr.bf16.mxu0 0
    %182 = vmatpush2.bf16.msra.mxu0 0
    %183 = vmatprep.subr.bf16.mxu0 0
    %184 = vmatpush2.bf16.msra.mxu0 0
    %185 = vmatprep.subr.bf16.mxu0 0
    %186 = vmatpush2.bf16.msra.mxu0 0
    %187 = vmatprep.subr.bf16.mxu0 0
    %188 = vmatpush2.bf16.msra.mxu0 0
    %189 = vmatprep.subr.bf16.mxu0 0
    %190 = vmatpush2.bf16.msra.mxu0 0
    %191 = vmatprep.subr.bf16.mxu0 0
    %192 = vmatpush2.bf16.msra.mxu0 0
    %193 = vmatprep.subr.bf16.mxu0 0
    %194 = vmatpush2.bf16.msra.mxu0 0
    %195 = vmatprep.subr.bf16.mxu0 0
    %196 = vmatpush2.bf16.msra.mxu0 0
    %197 = vmatprep.mubr.bf16.mxu0 0
    %198 = vmatmul.mubr.bf16.gmra.mxu0 %v163
    %v199 = vpop.f32.mrf.mxu0
    %v200 = vadd.f32 0.0, %v199
    %v201 = vpop.f32.mrf.mxu0
    %v202 = vpop.f32.mrf.mxu0
    %v203 = vadd.f32 0.0, %v202
    %v204 = vpop.f32.mrf.mxu0
    %205 = vdwg.mxu0
    %v206 = vpack.c.bf16 %v203, %v200
    %v207 = vpack.c.bf16 %v155, %v154
    %v208 = vpack.c.bf16 %v157, %v156
    %v210 = vlaneseq
    %v211 = vshrl.u32 %v210, 7
    %v212 = vsub.s32 0, %v211
    %v213 = vrot.slane %v158, %v212
    %vm215 = vcmask 261120
    %v217 = vsel %vm215, %v206, 0
    %219 = vmatprep.subr.bf16.mxu0 0
    %220 = vmatpush1.bf16.msra.mxu0 0
    %221 = vmatprep.subr.bf16.mxu0 0
    %222 = vmatpush1.bf16.msra.mxu0 0
    %223 = vmatprep.subr.bf16.mxu0 0
    %224 = vmatpush1.bf16.msra.mxu0 0
    %225 = vmatprep.subr.bf16.mxu0 0
    %226 = vmatpush1.bf16.msra.mxu0 0
    %227 = vmatprep.subr.bf16.mxu0 0
    %228 = vmatpush1.bf16.msra.mxu0 0
    %229 = vmatprep.subr.bf16.mxu0 0
    %230 = vmatpush1.bf16.msra.mxu0 0
    %231 = vmatprep.subr.bf16.mxu0 0
    %232 = vmatpush1.bf16.msra.mxu0 %v208
    %233 = vmatprep.subr.bf16.mxu0 0
    %234 = vmatpush1.bf16.msra.mxu0 %v207
    %235 = vmatprep.subr.bf16.mxu0 0
    %236 = vmatpush2.bf16.msra.mxu0 0
    %237 = vmatprep.subr.bf16.mxu0 0
    %238 = vmatpush2.bf16.msra.mxu0 0
    %239 = vmatprep.subr.bf16.mxu0 0
    %240 = vmatpush2.bf16.msra.mxu0 0
    %241 = vmatprep.subr.bf16.mxu0 0
    %242 = vmatpush2.bf16.msra.mxu0 0
    %243 = vmatprep.subr.bf16.mxu0 0
    %244 = vmatpush2.bf16.msra.mxu0 0
    %245 = vmatprep.subr.bf16.mxu0 0
    %246 = vmatpush2.bf16.msra.mxu0 0
    %247 = vmatprep.subr.bf16.mxu0 0
    %248 = vmatpush2.bf16.msra.mxu0 0
    %249 = vmatprep.subr.bf16.mxu0 0
    %250 = vmatpush2.bf16.msra.mxu0 0
    %251 = vmatprep.mubr.bf16.mxu0 0
    %252 = vmatmul.mubr.bf16.gmra.mxu0 %v217
    %v253 = vpop.f32.mrf.mxu0
    %v254 = vadd.f32 %v213, %v253
    %v255 = vpop.f32.mrf.mxu0
    %v256 = vpop.f32.mrf.mxu0
    %v257 = vadd.f32 %v213, %v256
    %v258 = vpop.f32.mrf.mxu0
    %259 = vdwg.mxu0
    %v260 = vmax.f32 %v254, 0.0
    %v261 = vmax.f32 %v257, 0.0
    %v262 = vld [vmem:[%s6] sm:$0xff]
    %v263 = vld [vmem:[%s6 + $0x8] sm:$0xff]
    %v264 = vadd.f32 %v260, %v262
    %v265 = vadd.f32 %v261, %v263
    %266 = vst.msk [vmem:[#allocation2] sm:$0xff] %vm215, %v264
    %267 = vst.msk [vmem:[#allocation2 + $0x8] sm:$0xff] %vm215, %v265
    %v268 = vld [vmem:[%s7] sm:$0xff]
    %v269 = vld [vmem:[%s7 + $0x8] sm:$0xff]
    %v270 = vadd.f32 %v264, %v268
    %v271 = vadd.f32 %v265, %v269
    %272 = vst.msk [vmem:[#allocation4] sm:$0xff] %vm215, %v270
    %273 = vst.msk [vmem:[#allocation4 + $0x8] sm:$0xff] %vm215, %v271
    // Predicated region
    $region34: #{_lambda_.9} parent=1 // pred_check
      _
    $region35: #{_lambda_.9} parent=1 // pred_check_branch
      %275 = sbr.rel (0) target = $region37
    $region36: #{_lambda_.9} parent=1 // pred_region
      %s277 = ssub.s32 256, 256
      %278 = vsyncadd [#allocation3], %s277
      %s279 = sshll.u32 [#allocation2], 4
      %s280 = int_to_ptr.vmem [resolvable:$true] %s279
      %285 = dma.vmem_to_hbm [thread:$0]  %s280, 256, %s8, [#allocation3], 128, 128, 8
    $region37: #{_lambda_.9} parent=1 // pred_fallthru
      _
    // Predicated region
    $region38: #{_lambda_.9} parent=1 // pred_check
      _
    $region39: #{_lambda_.9} parent=1 // pred_check_branch
      %287 = sbr.rel (0) target = $region41
    $region40: #{_lambda_.9} parent=1 // pred_region
      %s289 = ssub.s32 256, 256
      %290 = vsyncadd [#allocation5], %s289
      %s291 = sshll.u32 [#allocation4], 4
      %s292 = int_to_ptr.vmem [resolvable:$true] %s291
      %297 = dma.vmem_to_hbm [thread:$0]  %s292, 256, %s9, [#allocation5], 128, 128, 8
    $region41: #{_lambda_.9} parent=1 // pred_fallthru
      _
    // Predicated region
    $region42: #{_lambda_.9} parent=1 // pred_check
      _
    $region43: #{_lambda_.9} parent=1 // pred_check_branch
      %299 = sbr.rel (0) target = $region45
    $region44: #{_lambda_.9} parent=1 // pred_region
      %300 = dma.done [#allocation3], 256
    $region45: #{_lambda_.9} parent=1 // pred_fallthru
      _
    // Predicated region
    $region46: #{_lambda_.9} parent=1 // pred_check
      _
    $region47: #{_lambda_.9} parent=1 // pred_check_branch
      %302 = sbr.rel (0) target = $region49
    $region48: #{_lambda_.9} parent=1 // pred_region
      %303 = dma.done [#allocation5], 256
    $region49: #{_lambda_.9} parent=1 // pred_fallthru
      _
    %304 = vsyncpa [#allocation3], 1
    %305 = vsyncpa [#allocation5], 1

// kernel: _lambda_.8
$region0: #{_lambda_.8}
  #allocation0 [shape = 'u32[]', space=smem, size = 0x4, offset = 0x4, fixed_abs, tag = 'smem constant byte address 0x4 - core index']
  #allocation1 [shape = 'u32[144,128]{1,0:T(1,128)}', space=vmem, size = 0x12000, scoped, tag = 'internal scratch']
  %s0 = inlined_call_operand.vmem [shape: f32[12,12], index: 0, kind: input, shape index: {}]
  %s1 = inlined_call_operand.vmem [shape: f32[12,1], index: 1, kind: input, shape index: {}]
  %s2 = inlined_call_operand.vmem [shape: s32[1,7], index: 2, kind: input, shape index: {}]
  %s3 = inlined_call_operand.vmem [shape: f32[7,32], index: 3, kind: input, shape index: {}]
  %s4 = inlined_call_operand.vmem [shape: f32[32,32], index: 4, kind: input, shape index: {}]
  %s5 = inlined_call_operand.vmem [shape: f32[1,32], index: 5, kind: input, shape index: {}]
  %s6 = inlined_call_operand.vmem [shape: f32[12,32], index: 6, kind: input, shape index: {}]
  %s7 = inlined_call_operand.vmem [shape: f32[12,32], index: 7, kind: output, shape index: {}]
  %s8 = sld [smem:[#allocation0]]
  $region38: #{_lambda_.8} parent=0
    _
  %s10 = ssub.s32 1, %s8
  %s11 = scalar_select 0, %s10, %s8
  // Predicated region
  $region2: #{_lambda_.8} parent=0 // pred_check
    _
  $region3: #{_lambda_.8} parent=0 // pred_check_branch
    %13 = sbr.rel (0) target = $region5
  $region4: #{_lambda_.8} parent=0 // pred_region
    _
  $region5: #{_lambda_.8} parent=0 // pred_fallthru
    _
  // Predicated region
  $region6: #{_lambda_.8} parent=0 // pred_check
    _
  $region7: #{_lambda_.8} parent=0 // pred_check_branch
    %15 = sbr.rel (0) target = $region9
  $region8: #{_lambda_.8} parent=0 // pred_region
    _
  $region9: #{_lambda_.8} parent=0 // pred_fallthru
    _
  // Predicated region
  $region10: #{_lambda_.8} parent=0 // pred_check
    _
  $region11: #{_lambda_.8} parent=0 // pred_check_branch
    %17 = sbr.rel (0) target = $region13
  $region12: #{_lambda_.8} parent=0 // pred_region
    _
  $region13: #{_lambda_.8} parent=0 // pred_fallthru
    _
  // Predicated region
  $region14: #{_lambda_.8} parent=0 // pred_check
    _
  $region15: #{_lambda_.8} parent=0 // pred_check_branch
    %19 = sbr.rel (0) target = $region17
  $region16: #{_lambda_.8} parent=0 // pred_region
    _
  $region17: #{_lambda_.8} parent=0 // pred_fallthru
    _
  // Predicated region
  $region18: #{_lambda_.8} parent=0 // pred_check
    _
  $region19: #{_lambda_.8} parent=0 // pred_check_branch
    %21 = sbr.rel (0) target = $region21
  $region20: #{_lambda_.8} parent=0 // pred_region
    _
  $region21: #{_lambda_.8} parent=0 // pred_fallthru
    _
  // Predicated region
  $region22: #{_lambda_.8} parent=0 // pred_check
    _
  $region23: #{_lambda_.8} parent=0 // pred_check_branch
    %23 = sbr.rel (0) target = $region25
  $region24: #{_lambda_.8} parent=0 // pred_region
    _
  $region25: #{_lambda_.8} parent=0 // pred_fallthru
    _
  // Predicated region
  $region26: #{_lambda_.8} parent=0 // pred_check
    _
  $region27: #{_lambda_.8} parent=0 // pred_check_branch
    %25 = sbr.rel (0) target = $region29
  $region28: #{_lambda_.8} parent=0 // pred_region
    _
  $region29: #{_lambda_.8} parent=0 // pred_fallthru
    _
  %v27 = vld [vmem:[%s2] sm:$0x1]
  %v28 = vlaneseq
  %v29 = vshrl.u32 %v28, 7
  %v30 = vadd.s32 %v29, 8
  %v31 = vlaneseq
  %v32 = vshrl.u32 %v31, 7
  %v33 = vsub.s32 0, %v32
  %v34 = vrot.slane %v27, %v33
  %vm35 = vcmp.eq.s32.totalorder %v29, %v34
  %vm36 = vcmp.eq.s32.totalorder %v30, %v34
  %v37 = vsel %vm35, 1, 0
  %v38 = vsel %vm36, 1, 0
  %v39 = vcvt.s32.f32 %v37
  %v40 = vcvt.s32.f32 %v38
  %v41 = vld [vmem:[%s3] sm:$0x7f]
  %vm42 = vcmask 56320
  %v44 = vsel %vm42, %v39, 0
  %v47 = vsel %vm42, %v40, 0
  %vm49 = vcmask 1046528
  %v51 = vsel %vm49, %v41, 0
  %53 = vmatprep.subr.mxu0 0.0
  %54 = vmatpush1.msra.mxu0 0.0
  %55 = vmatprep.subr.mxu0 0.0
  %56 = vmatpush1.msra.mxu0 0.0
  %57 = vmatprep.subr.mxu0 0.0
  %58 = vmatpush1.msra.mxu0 0.0
  %59 = vmatprep.subr.mxu0 0.0
  %60 = vmatpush1.msra.mxu0 0.0
  %61 = vmatprep.subr.mxu0 0.0
  %62 = vmatpush1.msra.mxu0 0.0
  %63 = vmatprep.subr.mxu0 0.0
  %64 = vmatpush1.msra.mxu0 0.0
  %65 = vmatprep.subr.mxu0 0.0
  %66 = vmatpush1.msra.mxu0 0.0
  %67 = vmatprep.subr.mxu0 0.0
  %68 = vmatpush1.msra.mxu0 0.0
  %69 = vmatprep.subr.mxu0 0.0
  %70 = vmatpush1.msra.mxu0 0.0
  %71 = vmatprep.subr.mxu0 0.0
  %72 = vmatpush1.msra.mxu0 0.0
  %73 = vmatprep.subr.mxu0 0.0
  %74 = vmatpush1.msra.mxu0 0.0
  %75 = vmatprep.subr.mxu0 0.0
  %76 = vmatpush1.msra.mxu0 0.0
  %77 = vmatprep.subr.mxu0 0.0
  %78 = vmatpush1.msra.mxu0 0.0
  %79 = vmatprep.subr.mxu0 0.0
  %80 = vmatpush1.msra.mxu0 0.0
  %81 = vmatprep.subr.mxu0 0.0
  %82 = vmatpush1.msra.mxu0 0.0
  %83 = vmatprep.subr.mxu0 0.0
  %84 = vmatpush1.msra.mxu0 %v51
  %85 = vmatprep.subr.mxu0 0.0
  %86 = vmatpush2.msra.mxu0 0.0
  %87 = vmatprep.subr.mxu0 0.0
  %88 = vmatpush2.msra.mxu0 0.0
  %89 = vmatprep.subr.mxu0 0.0
  %90 = vmatpush2.msra.mxu0 0.0
  %91 = vmatprep.subr.mxu0 0.0
  %92 = vmatpush2.msra.mxu0 0.0
  %93 = vmatprep.subr.mxu0 0.0
  %94 = vmatpush2.msra.mxu0 0.0
  %95 = vmatprep.subr.mxu0 0.0
  %96 = vmatpush2.msra.mxu0 0.0
  %97 = vmatprep.subr.mxu0 0.0
  %98 = vmatpush2.msra.mxu0 0.0
  %99 = vmatprep.subr.mxu0 0.0
  %100 = vmatpush2.msra.mxu0 0.0
  %101 = vmatprep.subr.mxu0 0.0
  %102 = vmatpush2.msra.mxu0 0.0
  %103 = vmatprep.subr.mxu0 0.0
  %104 = vmatpush2.msra.mxu0 0.0
  %105 = vmatprep.subr.mxu0 0.0
  %106 = vmatpush2.msra.mxu0 0.0
  %107 = vmatprep.subr.mxu0 0.0
  %108 = vmatpush2.msra.mxu0 0.0
  %109 = vmatprep.subr.mxu0 0.0
  %110 = vmatpush2.msra.mxu0 0.0
  %111 = vmatprep.subr.mxu0 0.0
  %112 = vmatpush2.msra.mxu0 0.0
  %113 = vmatprep.subr.mxu0 0.0
  %114 = vmatpush2.msra.mxu0 0.0
  %115 = vmatprep.subr.mxu0 0.0
  %116 = vmatpush2.msra.mxu0 0.0
  %117 = vmatprep.mubr.f32.mxu0 0.0
  %118 = vmatmul.mubr.f32.gmra.mxu0 %v44
  %v119 = vpop.f32.mrf.mxu0
  %v120 = vadd.f32 0.0, %v119
  %v121 = vpop.f32.mrf.mxu0
  %122 = vmatprep.mubr.f32.mxu0 0.0
  %123 = vmatmul.mubr.f32.gmra.mxu0 %v47
  %v124 = vpop.f32.mrf.mxu0
  %v125 = vadd.f32 0.0, %v124
  %v126 = vpop.f32.mrf.mxu0
  %127 = vdwg.mxu0
  %v128 = vld [vmem:[%s1] sm:$0xff]
  %v129 = vld [vmem:[%s1 + $0x8] sm:$0xf]
  %131 = vset.pattern.permute.xlu0 0
  %132 = vperm.xlu0 %131, %v128
  %v133 = vpop.permute.xlu0 %132
  %136 = vset.pattern.permute.xlu0 0
  %137 = vperm.xlu0 %136, %v129
  %v138 = vpop.permute.xlu0 %137
  %v140 = vrcp.pop %v133
  %v141 = vmul.f32 %v120, %v140
  %v142 = vrcp.pop %v138
  %v143 = vmul.f32 %v125, %v142
  %v144 = vld [vmem:[%s0] sm:$0xff]
  %v145 = vld [vmem:[%s0 + $0x8] sm:$0xf]
  %v146 = vld [vmem:[%s4] sm:$0xff]
  %v147 = vld [vmem:[%s4 + $0x8] sm:$0xff]
  %v148 = vld [vmem:[%s4 + $0x10] sm:$0xff]
  %v149 = vld [vmem:[%s4 + $0x18] sm:$0xff]
  %v150 = vld [vmem:[%s5] sm:$0x1]
  %v151 = vpack.c.bf16 %v145, %v144
  %v152 = vpack.c.bf16 %v143, %v141
  %vm153 = vcmask 97280
  %v155 = vsel %vm153, %v151, 0
  %vm157 = vcmask 1045504
  %v159 = vsel %vm157, %v152, 0
  %161 = vmatprep.subr.bf16.mxu0 0
  %162 = vmatpush1.bf16.msra.mxu0 0
  %163 = vmatprep.subr.bf16.mxu0 0
  %164 = vmatpush1.bf16.msra.mxu0 0
  %165 = vmatprep.subr.bf16.mxu0 0
  %166 = vmatpush1.bf16.msra.mxu0 0
  %167 = vmatprep.subr.bf16.mxu0 0
  %168 = vmatpush1.bf16.msra.mxu0 0
  %169 = vmatprep.subr.bf16.mxu0 0
  %170 = vmatpush1.bf16.msra.mxu0 0
  %171 = vmatprep.subr.bf16.mxu0 0
  %172 = vmatpush1.bf16.msra.mxu0 0
  %173 = vmatprep.subr.bf16.mxu0 0
  %174 = vmatpush1.bf16.msra.mxu0 0
  %175 = vmatprep.subr.bf16.mxu0 0
  %176 = vmatpush1.bf16.msra.mxu0 %v159
  %177 = vmatprep.subr.bf16.mxu0 0
  %178 = vmatpush2.bf16.msra.mxu0 0
  %179 = vmatprep.subr.bf16.mxu0 0
  %180 = vmatpush2.bf16.msra.mxu0 0
  %181 = vmatprep.subr.bf16.mxu0 0
  %182 = vmatpush2.bf16.msra.mxu0 0
  %183 = vmatprep.subr.bf16.mxu0 0
  %184 = vmatpush2.bf16.msra.mxu0 0
  %185 = vmatprep.subr.bf16.mxu0 0
  %186 = vmatpush2.bf16.msra.mxu0 0
  %187 = vmatprep.subr.bf16.mxu0 0
  %188 = vmatpush2.bf16.msra.mxu0 0
  %189 = vmatprep.subr.bf16.mxu0 0
  %190 = vmatpush2.bf16.msra.mxu0 0
  %191 = vmatprep.subr.bf16.mxu0 0
  %192 = vmatpush2.bf16.msra.mxu0 0
  %193 = vmatprep.mubr.bf16.mxu0 0
  %194 = vmatmul.mubr.bf16.gmra.mxu0 %v155
  %v195 = vpop.f32.mrf.mxu0
  %v196 = vadd.f32 0.0, %v195
  %v197 = vpop.f32.mrf.mxu0
  %v198 = vpop.f32.mrf.mxu0
  %v199 = vadd.f32 0.0, %v198
  %v200 = vpop.f32.mrf.mxu0
  %201 = vdwg.mxu0
  %v202 = vpack.c.bf16 %v199, %v196
  %v203 = vpack.c.bf16 %v147, %v146
  %v204 = vpack.c.bf16 %v149, %v148
  %v206 = vlaneseq
  %v207 = vshrl.u32 %v206, 7
  %v208 = vsub.s32 0, %v207
  %v209 = vrot.slane %v150, %v208
  %vm211 = vcmask 261120
  %v213 = vsel %vm211, %v202, 0
  %215 = vmatprep.subr.bf16.mxu0 0
  %216 = vmatpush1.bf16.msra.mxu0 0
  %217 = vmatprep.subr.bf16.mxu0 0
  %218 = vmatpush1.bf16.msra.mxu0 0
  %219 = vmatprep.subr.bf16.mxu0 0
  %220 = vmatpush1.bf16.msra.mxu0 0
  %221 = vmatprep.subr.bf16.mxu0 0
  %222 = vmatpush1.bf16.msra.mxu0 0
  %223 = vmatprep.subr.bf16.mxu0 0
  %224 = vmatpush1.bf16.msra.mxu0 0
  %225 = vmatprep.subr.bf16.mxu0 0
  %226 = vmatpush1.bf16.msra.mxu0 0
  %227 = vmatprep.subr.bf16.mxu0 0
  %228 = vmatpush1.bf16.msra.mxu0 %v204
  %229 = vmatprep.subr.bf16.mxu0 0
  %230 = vmatpush1.bf16.msra.mxu0 %v203
  %231 = vmatprep.subr.bf16.mxu0 0
  %232 = vmatpush2.bf16.msra.mxu0 0
  %233 = vmatprep.subr.bf16.mxu0 0
  %234 = vmatpush2.bf16.msra.mxu0 0
  %235 = vmatprep.subr.bf16.mxu0 0
  %236 = vmatpush2.bf16.msra.mxu0 0
  %237 = vmatprep.subr.bf16.mxu0 0
  %238 = vmatpush2.bf16.msra.mxu0 0
  %239 = vmatprep.subr.bf16.mxu0 0
  %240 = vmatpush2.bf16.msra.mxu0 0
  %241 = vmatprep.subr.bf16.mxu0 0
  %242 = vmatpush2.bf16.msra.mxu0 0
  %243 = vmatprep.subr.bf16.mxu0 0
  %244 = vmatpush2.bf16.msra.mxu0 0
  %245 = vmatprep.subr.bf16.mxu0 0
  %246 = vmatpush2.bf16.msra.mxu0 0
  %247 = vmatprep.mubr.bf16.mxu0 0
  %248 = vmatmul.mubr.bf16.gmra.mxu0 %v213
  %v249 = vpop.f32.mrf.mxu0
  %v250 = vadd.f32 %v209, %v249
  %v251 = vpop.f32.mrf.mxu0
  %v252 = vpop.f32.mrf.mxu0
  %v253 = vadd.f32 %v209, %v252
  %v254 = vpop.f32.mrf.mxu0
  %255 = vdwg.mxu0
  %v256 = vmax.f32 %v250, 0.0
  %v257 = vmax.f32 %v253, 0.0
  %v258 = vld [vmem:[%s6] sm:$0xff]
  %v259 = vld [vmem:[%s6 + $0x8] sm:$0xf]
  %v260 = vadd.f32 %v256, %v258
  %v261 = vadd.f32 %v257, %v259
  %262 = vst.msk [vmem:[%s7] sm:$0xff] %vm211, %v260
  %vm263 = vcmask 257024
  %264 = vst.msk [vmem:[%s7 + $0x8] sm:$0xf] %vm263, %v261
  // Predicated region
  $region30: #{_lambda_.8} parent=0 // pred_check
    _
  $region31: #{_lambda_.8} parent=0 // pred_check_branch
    %266 = sbr.rel (0) target = $region33
  $region32: #{_lambda_.8} parent=0 // pred_region
    _
  $region33: #{_lambda_.8} parent=0 // pred_fallthru
    _
  // Predicated region
  $region34: #{_lambda_.8} parent=0 // pred_check
    _
  $region35: #{_lambda_.8} parent=0 // pred_check_branch
    %268 = sbr.rel (0) target = $region37
  $region36: #{_lambda_.8} parent=0 // pred_region
    _
  $region37: #{_lambda_.8} parent=0 // pred_fallthru
    _

</llo_original>
